<compile_context>
chip_gen: v7x
topology: tpu7x:2x2x1
jax: 0.10.0
libtpu: 0.0.40
codegen_flags: <defaults>
</compile_context>

<pallas_src>
import jax
import jax.numpy as jnp
from jax.experimental import pallas as pl
from jax.experimental.pallas import tpu as pltpu


# ------------------------------------------------------------------ kernel ---

def _make_fusion_kernel(H, W, c_in, c_out, has_shortcut):
    """Fused FusionConv kernel body: two residual DoubleConv blocks, one batch element."""

    def kernel(*refs):
        if has_shortcut:
            (x_ref, w1a, b1a, w1b, b1b, w1s, b1s,
             w2a, b2a, w2b, b2b, o_ref) = refs
        else:
            (x_ref, w1a, b1a, w1b, b1b,
             w2a, b2a, w2b, b2b, o_ref) = refs

        # Halo masks (top row / bottom row), built once per activation width and
        # reused by every conv of that width (avoids re-emitting iota/broadcasts).
        mask_cache = {}

        def masks_for(width):
            if width not in mask_cache:
                rows = jax.lax.broadcasted_iota(jnp.int32, (H, width), 0)
                mask_cache[width] = (rows == 0, rows == H - 1)
            return mask_cache[width]

        def conv3x3(x, w_ref, b_ref):
            # x:     (H, W*cin)         lane-dense activation (NHWC flattened over (W, C))
            # w_ref: (3, W*cin, W*cout) block-Toeplitz expanded, BN-folded weights
            # b_ref: (1, W*cout)        bias tiled across W
            is_top, is_bot = masks_for(x.shape[1])
            # Row h of x_up holds x[h-1] (zero halo at h=0); x_dn holds x[h+1]
            # (zero halo at h=H-1).  pltpu.roll is circular with non-negative
            # shift, so shift=H-1 realizes the "-1" roll; wrapped rows are masked.
            x_up = jnp.where(is_top, 0.0, pltpu.roll(x, shift=1, axis=0))
            x_dn = jnp.where(is_bot, 0.0, pltpu.roll(x, shift=H - 1, axis=0))
            acc = jnp.dot(x_up, w_ref[0], preferred_element_type=jnp.float32)
            acc = acc + jnp.dot(x, w_ref[1], preferred_element_type=jnp.float32)
            acc = acc + jnp.dot(x_dn, w_ref[2], preferred_element_type=jnp.float32)
            return acc + b_ref[...]

        x = x_ref[0]                                               # (H, W*c_in)

        # ---------------- DoubleConv 1 (c_in -> c_out) ----------------
        t = jnp.maximum(conv3x3(x, w1a, b1a), 0.0)                 # conv -> BN -> ReLU
        if has_shortcut:
            identity = conv3x3(x, w1s, b1s)                        # shortcut conv -> BN
        else:
            identity = x
        y1 = jnp.maximum(conv3x3(t, w1b, b1b) + identity, 0.0)     # conv -> BN, +res, ReLU

        # ---------------- DoubleConv 2 (c_out -> c_out) ----------------
        t2 = jnp.maximum(conv3x3(y1, w2a, b2a), 0.0)
        y2 = jnp.maximum(conv3x3(t2, w2b, b2b) + y1, 0.0)

        o_ref[0] = y2.astype(o_ref.dtype)

    return kernel


def _fusion_conv_call(x_flat, kparams, H, W, c_in, c_out, has_shortcut):
    N = x_flat.shape[0]

    order = ["c1a", "c1b"] + (["c1s"] if has_shortcut else []) + ["c2a", "c2b"]
    args = [x_flat]
    in_specs = [pl.BlockSpec((1, H, W * c_in), lambda n: (n, 0, 0))]
    for name in order:
        w3, bt = kparams[name]
        args.extend([w3, bt])
        # Weights/biases are grid-invariant: same block index every step, so they
        # are DMA'd to VMEM once and stay resident.
        in_specs.append(pl.BlockSpec(w3.shape, lambda n: (0, 0, 0)))
        in_specs.append(pl.BlockSpec(bt.shape, lambda n: (0, 0)))

    return pl.pallas_call(
        _make_fusion_kernel(H, W, c_in, c_out, has_shortcut),
        out_shape=jax.ShapeDtypeStruct((N, H, W * c_out), jnp.float32),
        grid=(N,),
        in_specs=in_specs,
        out_specs=pl.BlockSpec((1, H, W * c_out), lambda n: (n, 0, 0)),
        compiler_params=pltpu.CompilerParams(
            dimension_semantics=("parallel",)),
    )(*args)


# --------------------------------------------------------------- parameters --

def _fold_bn(w_oihw, gamma, beta, mean, var, eps=1e-5):
    """Fold Conv2d(bias=False) + BatchNorm2d (eval) into HWIO weights + bias."""
    scale = gamma / jnp.sqrt(var + eps)
    w = w_oihw * scale[:, None, None, None]                    # (Cout, Cin, 3, 3)
    b = beta - mean * scale                                    # (Cout,)
    return jnp.transpose(w, (2, 3, 1, 0)), b                   # (3, 3, Cin, Cout), (Cout,)


def _init_conv_bn(key, cin, cout):
    """Deterministic conv weight + default-initialized BN (gamma=1, beta=0, mean=0, var=1)."""
    fan_in = cin * 9
    w = jax.random.normal(key, (cout, cin, 3, 3), jnp.float32) * (2.0 / fan_in) ** 0.5
    gamma = jnp.ones((cout,), jnp.float32)
    beta = jnp.zeros((cout,), jnp.float32)
    mean = jnp.zeros((cout,), jnp.float32)
    var = jnp.ones((cout,), jnp.float32)
    return _fold_bn(w, gamma, beta, mean, var)


def init_double_conv(key, cin, cout):
    k1, k2, k3 = jax.random.split(key, 3)
    params = {
        "conv_a": _init_conv_bn(k1, cin, cout),    # conv -> BN -> ReLU   (mid = cout)
        "conv_b": _init_conv_bn(k2, cout, cout),   # conv -> BN
    }
    if cin != cout:
        params["shortcut"] = _init_conv_bn(k3, cin, cout)
    return params


def init_fusion_conv(key, num_features_in, num_features_out):
    k1, k2 = jax.random.split(key)
    return {
        "conv1": init_double_conv(k1, num_features_in, num_features_out),
        "conv2": init_double_conv(k2, num_features_out, num_features_out),
    }


def _expand_conv(wt_hwio, b, W):
    """Repack a BN-folded 3x3 conv into block-Toeplitz matmul weights.

    Returns ((3, W*Cin, W*Cout) weights  -- kw shift + W-direction zero padding baked in,
             (1, W*Cout) bias tiled across W).
    """
    _, _, cin, cout = wt_hwio.shape
    # S[kw, w_src, w_dst] = 1  iff  w_src == w_dst + kw - 1
    S = jnp.stack([jnp.eye(W, W, k=-(kw - 1), dtype=wt_hwio.dtype) for kw in range(3)])
    w3 = jnp.einsum("xpw,hxio->hpiwo", S, wt_hwio)             # (3, W, Cin, W, Cout)
    w3 = w3.reshape(3, W * cin, W * cout)
    b_tiled = jnp.tile(b, W).reshape(1, W * cout)
    return w3, b_tiled


def prepare_fusion_params(params, W):
    """One-time repack of FusionConv parameters into the kernel's lane-dense layout."""
    kp = {
        "c1a": _expand_conv(*params["conv1"]["conv_a"], W),
        "c1b": _expand_conv(*params["conv1"]["conv_b"], W),
        "c2a": _expand_conv(*params["conv2"]["conv_a"], W),
        "c2b": _expand_conv(*params["conv2"]["conv_b"], W),
    }
    if "shortcut" in params["conv1"]:
        kp["c1s"] = _expand_conv(*params["conv1"]["shortcut"], W)
    return kp


# ------------------------------------------------------------------ forward --

def fusion_conv(x_nchw, params, kparams=None):
    """FusionConv forward. x_nchw: (N, Cin, H, W) -> (N, Cout, H, W)."""
    N, c_in, H, W = x_nchw.shape
    c_out = params["conv1"]["conv_a"][0].shape[-1]
    if kparams is None:
        kparams = prepare_fusion_params(params, W)
    has_shortcut = "c1s" in kparams
    x_flat = jnp.transpose(x_nchw, (0, 2, 3, 1)).astype(jnp.float32)  # NCHW -> NHWC
    x_flat = x_flat.reshape(N, H, W * c_in)                           # lane-dense layout
    out_flat = _fusion_conv_call(x_flat, kparams, H, W, c_in, c_out, has_shortcut)
    return jnp.transpose(out_flat.reshape(N, H, W, c_out), (0, 3, 1, 2))  # back to NCHW


# -------------------------------------------------------- pure-JAX reference --

def _ref_conv(x_nhwc, wt_hwio, b):
    y = jax.lax.conv_general_dilated(
        x_nhwc, wt_hwio, window_strides=(1, 1), padding="SAME",
        dimension_numbers=("NHWC", "HWIO", "NHWC"))
    return y + b.reshape(1, 1, 1, -1)


def _ref_double_conv(x, params):
    t = jnp.maximum(_ref_conv(x, *params["conv_a"]), 0.0)
    y = _ref_conv(t, *params["conv_b"])
    identity = _ref_conv(x, *params["shortcut"]) if "shortcut" in params else x
    return jnp.maximum(y + identity, 0.0)


def _ref_fusion_conv(x_nchw, params):
    x = jnp.transpose(x_nchw, (0, 2, 3, 1)).astype(jnp.float32)
    out = _ref_double_conv(x, params["conv1"])
    out = _ref_double_conv(out, params["conv2"])
    return jnp.transpose(out, (0, 3, 1, 2))


# --------------------------------------------------------------------- main --

if __name__ == "__main__":
    key = jax.random.PRNGKey(0)
    k_x, k_p = jax.random.split(key)

    N, C_IN, C_OUT, H, W = 2, 4, 8, 16, 16
    x = jax.random.normal(k_x, (N, C_IN, H, W), jnp.float32)     # NCHW like PyTorch
    params = init_fusion_conv(k_p, C_IN, C_OUT)
    kparams = prepare_fusion_params(params, W)                   # one-time weight repack

    out = jax.block_until_ready(fusion_conv(x, params, kparams))
    assert out.shape == (N, C_OUT, H, W), out.shape

    ref = jax.block_until_ready(_ref_fusion_conv(x, params))
    assert jnp.allclose(out, ref, atol=1e-4, rtol=1e-4), float(jnp.abs(out - ref).max())

    print("KERNEL_OK")
</pallas_src>

<mosaic_0001>
module attributes {stable_mosaic.version = 11 : i64} {
  func.func @kernel(%arg0: i32, %arg1: memref<1x16x64xf32, #tpu.memory_space<vmem>>, %arg2: memref<3x64x128xf32, #tpu.memory_space<vmem>>, %arg3: memref<1x128xf32, #tpu.memory_space<vmem>>, %arg4: memref<3x128x128xf32, #tpu.memory_space<vmem>>, %arg5: memref<1x128xf32, #tpu.memory_space<vmem>>, %arg6: memref<3x64x128xf32, #tpu.memory_space<vmem>>, %arg7: memref<1x128xf32, #tpu.memory_space<vmem>>, %arg8: memref<3x128x128xf32, #tpu.memory_space<vmem>>, %arg9: memref<1x128xf32, #tpu.memory_space<vmem>>, %arg10: memref<3x128x128xf32, #tpu.memory_space<vmem>>, %arg11: memref<1x128xf32, #tpu.memory_space<vmem>>, %arg12: memref<1x16x128xf32, #tpu.memory_space<vmem>>) attributes {dimension_semantics = [#tpu.dimension_semantics<parallel>], iteration_bounds = array<i64: 2>, scalar_prefetch = 0 : i64, scratch_operands = 0 : i64, tpu.core_type = #tpu.core_type<tc>, window_params = [{transform_indices = @transform_0, window_bounds = array<i64: 1, 16, 64>}, {pipeline_mode = #tpu.pipeline_mode<synchronous>, transform_indices = @transform_1, window_bounds = array<i64: 3, 64, 128>}, {pipeline_mode = #tpu.pipeline_mode<synchronous>, transform_indices = @transform_2, window_bounds = array<i64: 1, 128>}, {pipeline_mode = #tpu.pipeline_mode<synchronous>, transform_indices = @transform_3, window_bounds = array<i64: 3, 128, 128>}, {pipeline_mode = #tpu.pipeline_mode<synchronous>, transform_indices = @transform_4, window_bounds = array<i64: 1, 128>}, {pipeline_mode = #tpu.pipeline_mode<synchronous>, transform_indices = @transform_5, window_bounds = array<i64: 3, 64, 128>}, {pipeline_mode = #tpu.pipeline_mode<synchronous>, transform_indices = @transform_6, window_bounds = array<i64: 1, 128>}, {pipeline_mode = #tpu.pipeline_mode<synchronous>, transform_indices = @transform_7, window_bounds = array<i64: 3, 128, 128>}, {pipeline_mode = #tpu.pipeline_mode<synchronous>, transform_indices = @transform_8, window_bounds = array<i64: 1, 128>}, {pipeline_mode = #tpu.pipeline_mode<synchronous>, transform_indices = @transform_9, window_bounds = array<i64: 3, 128, 128>}, {pipeline_mode = #tpu.pipeline_mode<synchronous>, transform_indices = @transform_10, window_bounds = array<i64: 1, 128>}, {transform_indices = @transform_11, window_bounds = array<i64: 1, 16, 128>}]} {
    %c0 = arith.constant 0 : index
    %c0_0 = arith.constant 0 : index
    %c0_1 = arith.constant 0 : index
    %0 = vector.load %arg1[%c0, %c0_0, %c0_1] : memref<1x16x64xf32, #tpu.memory_space<vmem>>, vector<1x16x64xf32>
    %1 = vector.shape_cast %0 : vector<1x16x64xf32> to vector<16x64xf32>
    %2 = tpu.iota {dimensions = array<i32: 0>} : vector<16x64xi32>
    %c0_i32 = arith.constant 0 : i32
    %3 = vector.broadcast %c0_i32 : i32 to vector<16x64xi32>
    %4 = arith.cmpi eq, %2, %3 : vector<16x64xi32>
    %c15_i32 = arith.constant 15 : i32
    %5 = vector.broadcast %c15_i32 : i32 to vector<16x64xi32>
    %6 = arith.cmpi eq, %2, %5 : vector<16x64xi32>
    %c1_i32 = arith.constant 1 : i32
    %7 = tpu.dynamic_rotate %1 by %c1_i32 dim 0 : vector<16x64xf32>, i32 -> vector<16x64xf32>
    %cst = arith.constant 0.000000e+00 : f32
    %8 = vector.broadcast %cst : f32 to vector<16x64xf32>
    %9 = arith.select %4, %8, %7 : vector<16x64xi1>, vector<16x64xf32>
    %c15_i32_2 = arith.constant 15 : i32
    %10 = tpu.dynamic_rotate %1 by %c15_i32_2 dim 0 : vector<16x64xf32>, i32 -> vector<16x64xf32>
    %cst_3 = arith.constant 0.000000e+00 : f32
    %11 = vector.broadcast %cst_3 : f32 to vector<16x64xf32>
    %12 = arith.select %6, %11, %10 : vector<16x64xi1>, vector<16x64xf32>
    %c0_4 = arith.constant 0 : index
    %c0_5 = arith.constant 0 : index
    %c0_6 = arith.constant 0 : index
    %13 = vector.load %arg2[%c0_4, %c0_5, %c0_6] : memref<3x64x128xf32, #tpu.memory_space<vmem>>, vector<1x64x128xf32>
    %14 = vector.shape_cast %13 : vector<1x64x128xf32> to vector<64x128xf32>
    %cst_7 = arith.constant dense<0.000000e+00> : vector<16x128xf32>
    %15 = tpu.matmul %9, %14, %cst_7 {dimension_numbers = #tpu.dot_dimension_numbers<[1], [0], [0], [1], [0, 0, 1, 1], [], []>} : vector<16x64xf32>, vector<64x128xf32>, vector<16x128xf32> -> vector<16x128xf32>
    %c1 = arith.constant 1 : index
    %c0_8 = arith.constant 0 : index
    %c0_9 = arith.constant 0 : index
    %16 = vector.load %arg2[%c1, %c0_8, %c0_9] : memref<3x64x128xf32, #tpu.memory_space<vmem>>, vector<1x64x128xf32>
    %17 = vector.shape_cast %16 : vector<1x64x128xf32> to vector<64x128xf32>
    %cst_10 = arith.constant dense<0.000000e+00> : vector<16x128xf32>
    %18 = tpu.matmul %1, %17, %cst_10 {dimension_numbers = #tpu.dot_dimension_numbers<[1], [0], [0], [1], [0, 0, 1, 1], [], []>} : vector<16x64xf32>, vector<64x128xf32>, vector<16x128xf32> -> vector<16x128xf32>
    %19 = arith.addf %15, %18 : vector<16x128xf32>
    %c2 = arith.constant 2 : index
    %c0_11 = arith.constant 0 : index
    %c0_12 = arith.constant 0 : index
    %20 = vector.load %arg2[%c2, %c0_11, %c0_12] : memref<3x64x128xf32, #tpu.memory_space<vmem>>, vector<1x64x128xf32>
    %21 = vector.shape_cast %20 : vector<1x64x128xf32> to vector<64x128xf32>
    %cst_13 = arith.constant dense<0.000000e+00> : vector<16x128xf32>
    %22 = tpu.matmul %12, %21, %cst_13 {dimension_numbers = #tpu.dot_dimension_numbers<[1], [0], [0], [1], [0, 0, 1, 1], [], []>} : vector<16x64xf32>, vector<64x128xf32>, vector<16x128xf32> -> vector<16x128xf32>
    %23 = arith.addf %19, %22 : vector<16x128xf32>
    %c0_14 = arith.constant 0 : index
    %c0_15 = arith.constant 0 : index
    %24 = vector.load %arg3[%c0_14, %c0_15] : memref<1x128xf32, #tpu.memory_space<vmem>>, vector<1x128xf32>
    %25 = vector.broadcast %24 : vector<1x128xf32> to vector<16x128xf32>
    %26 = arith.addf %23, %25 : vector<16x128xf32>
    %cst_16 = arith.constant 0.000000e+00 : f32
    %27 = vector.broadcast %cst_16 : f32 to vector<16x128xf32>
    %28 = arith.maximumf %26, %27 : vector<16x128xf32>
    %c1_i32_17 = arith.constant 1 : i32
    %29 = tpu.dynamic_rotate %1 by %c1_i32_17 dim 0 : vector<16x64xf32>, i32 -> vector<16x64xf32>
    %cst_18 = arith.constant 0.000000e+00 : f32
    %30 = vector.broadcast %cst_18 : f32 to vector<16x64xf32>
    %31 = arith.select %4, %30, %29 : vector<16x64xi1>, vector<16x64xf32>
    %c15_i32_19 = arith.constant 15 : i32
    %32 = tpu.dynamic_rotate %1 by %c15_i32_19 dim 0 : vector<16x64xf32>, i32 -> vector<16x64xf32>
    %cst_20 = arith.constant 0.000000e+00 : f32
    %33 = vector.broadcast %cst_20 : f32 to vector<16x64xf32>
    %34 = arith.select %6, %33, %32 : vector<16x64xi1>, vector<16x64xf32>
    %c0_21 = arith.constant 0 : index
    %c0_22 = arith.constant 0 : index
    %c0_23 = arith.constant 0 : index
    %35 = vector.load %arg6[%c0_21, %c0_22, %c0_23] : memref<3x64x128xf32, #tpu.memory_space<vmem>>, vector<1x64x128xf32>
    %36 = vector.shape_cast %35 : vector<1x64x128xf32> to vector<64x128xf32>
    %cst_24 = arith.constant dense<0.000000e+00> : vector<16x128xf32>
    %37 = tpu.matmul %31, %36, %cst_24 {dimension_numbers = #tpu.dot_dimension_numbers<[1], [0], [0], [1], [0, 0, 1, 1], [], []>} : vector<16x64xf32>, vector<64x128xf32>, vector<16x128xf32> -> vector<16x128xf32>
    %c1_25 = arith.constant 1 : index
    %c0_26 = arith.constant 0 : index
    %c0_27 = arith.constant 0 : index
    %38 = vector.load %arg6[%c1_25, %c0_26, %c0_27] : memref<3x64x128xf32, #tpu.memory_space<vmem>>, vector<1x64x128xf32>
    %39 = vector.shape_cast %38 : vector<1x64x128xf32> to vector<64x128xf32>
    %cst_28 = arith.constant dense<0.000000e+00> : vector<16x128xf32>
    %40 = tpu.matmul %1, %39, %cst_28 {dimension_numbers = #tpu.dot_dimension_numbers<[1], [0], [0], [1], [0, 0, 1, 1], [], []>} : vector<16x64xf32>, vector<64x128xf32>, vector<16x128xf32> -> vector<16x128xf32>
    %41 = arith.addf %37, %40 : vector<16x128xf32>
    %c2_29 = arith.constant 2 : index
    %c0_30 = arith.constant 0 : index
    %c0_31 = arith.constant 0 : index
    %42 = vector.load %arg6[%c2_29, %c0_30, %c0_31] : memref<3x64x128xf32, #tpu.memory_space<vmem>>, vector<1x64x128xf32>
    %43 = vector.shape_cast %42 : vector<1x64x128xf32> to vector<64x128xf32>
    %cst_32 = arith.constant dense<0.000000e+00> : vector<16x128xf32>
    %44 = tpu.matmul %34, %43, %cst_32 {dimension_numbers = #tpu.dot_dimension_numbers<[1], [0], [0], [1], [0, 0, 1, 1], [], []>} : vector<16x64xf32>, vector<64x128xf32>, vector<16x128xf32> -> vector<16x128xf32>
    %45 = arith.addf %41, %44 : vector<16x128xf32>
    %c0_33 = arith.constant 0 : index
    %c0_34 = arith.constant 0 : index
    %46 = vector.load %arg7[%c0_33, %c0_34] : memref<1x128xf32, #tpu.memory_space<vmem>>, vector<1x128xf32>
    %47 = vector.broadcast %46 : vector<1x128xf32> to vector<16x128xf32>
    %48 = arith.addf %45, %47 : vector<16x128xf32>
    %49 = tpu.iota {dimensions = array<i32: 0>} : vector<16x128xi32>
    %c0_i32_35 = arith.constant 0 : i32
    %50 = vector.broadcast %c0_i32_35 : i32 to vector<16x128xi32>
    %51 = arith.cmpi eq, %49, %50 : vector<16x128xi32>
    %c15_i32_36 = arith.constant 15 : i32
    %52 = vector.broadcast %c15_i32_36 : i32 to vector<16x128xi32>
    %53 = arith.cmpi eq, %49, %52 : vector<16x128xi32>
    %c1_i32_37 = arith.constant 1 : i32
    %54 = tpu.dynamic_rotate %28 by %c1_i32_37 dim 0 : vector<16x128xf32>, i32 -> vector<16x128xf32>
    %cst_38 = arith.constant 0.000000e+00 : f32
    %55 = vector.broadcast %cst_38 : f32 to vector<16x128xf32>
    %56 = arith.select %51, %55, %54 : vector<16x128xi1>, vector<16x128xf32>
    %c15_i32_39 = arith.constant 15 : i32
    %57 = tpu.dynamic_rotate %28 by %c15_i32_39 dim 0 : vector<16x128xf32>, i32 -> vector<16x128xf32>
    %cst_40 = arith.constant 0.000000e+00 : f32
    %58 = vector.broadcast %cst_40 : f32 to vector<16x128xf32>
    %59 = arith.select %53, %58, %57 : vector<16x128xi1>, vector<16x128xf32>
    %c0_41 = arith.constant 0 : index
    %c0_42 = arith.constant 0 : index
    %c0_43 = arith.constant 0 : index
    %60 = vector.load %arg4[%c0_41, %c0_42, %c0_43] : memref<3x128x128xf32, #tpu.memory_space<vmem>>, vector<1x128x128xf32>
    %61 = vector.shape_cast %60 : vector<1x128x128xf32> to vector<128x128xf32>
    %cst_44 = arith.constant dense<0.000000e+00> : vector<16x128xf32>
    %62 = tpu.matmul %56, %61, %cst_44 {dimension_numbers = #tpu.dot_dimension_numbers<[1], [0], [0], [1], [0, 0, 1, 1], [], []>} : vector<16x128xf32>, vector<128x128xf32>, vector<16x128xf32> -> vector<16x128xf32>
    %c1_45 = arith.constant 1 : index
    %c0_46 = arith.constant 0 : index
    %c0_47 = arith.constant 0 : index
    %63 = vector.load %arg4[%c1_45, %c0_46, %c0_47] : memref<3x128x128xf32, #tpu.memory_space<vmem>>, vector<1x128x128xf32>
    %64 = vector.shape_cast %63 : vector<1x128x128xf32> to vector<128x128xf32>
    %cst_48 = arith.constant dense<0.000000e+00> : vector<16x128xf32>
    %65 = tpu.matmul %28, %64, %cst_48 {dimension_numbers = #tpu.dot_dimension_numbers<[1], [0], [0], [1], [0, 0, 1, 1], [], []>} : vector<16x128xf32>, vector<128x128xf32>, vector<16x128xf32> -> vector<16x128xf32>
    %66 = arith.addf %62, %65 : vector<16x128xf32>
    %c2_49 = arith.constant 2 : index
    %c0_50 = arith.constant 0 : index
    %c0_51 = arith.constant 0 : index
    %67 = vector.load %arg4[%c2_49, %c0_50, %c0_51] : memref<3x128x128xf32, #tpu.memory_space<vmem>>, vector<1x128x128xf32>
    %68 = vector.shape_cast %67 : vector<1x128x128xf32> to vector<128x128xf32>
    %cst_52 = arith.constant dense<0.000000e+00> : vector<16x128xf32>
    %69 = tpu.matmul %59, %68, %cst_52 {dimension_numbers = #tpu.dot_dimension_numbers<[1], [0], [0], [1], [0, 0, 1, 1], [], []>} : vector<16x128xf32>, vector<128x128xf32>, vector<16x128xf32> -> vector<16x128xf32>
    %70 = arith.addf %66, %69 : vector<16x128xf32>
    %c0_53 = arith.constant 0 : index
    %c0_54 = arith.constant 0 : index
    %71 = vector.load %arg5[%c0_53, %c0_54] : memref<1x128xf32, #tpu.memory_space<vmem>>, vector<1x128xf32>
    %72 = vector.broadcast %71 : vector<1x128xf32> to vector<16x128xf32>
    %73 = arith.addf %70, %72 : vector<16x128xf32>
    %74 = arith.addf %73, %48 : vector<16x128xf32>
    %cst_55 = arith.constant 0.000000e+00 : f32
    %75 = vector.broadcast %cst_55 : f32 to vector<16x128xf32>
    %76 = arith.maximumf %74, %75 : vector<16x128xf32>
    %c1_i32_56 = arith.constant 1 : i32
    %77 = tpu.dynamic_rotate %76 by %c1_i32_56 dim 0 : vector<16x128xf32>, i32 -> vector<16x128xf32>
    %cst_57 = arith.constant 0.000000e+00 : f32
    %78 = vector.broadcast %cst_57 : f32 to vector<16x128xf32>
    %79 = arith.select %51, %78, %77 : vector<16x128xi1>, vector<16x128xf32>
    %c15_i32_58 = arith.constant 15 : i32
    %80 = tpu.dynamic_rotate %76 by %c15_i32_58 dim 0 : vector<16x128xf32>, i32 -> vector<16x128xf32>
    %cst_59 = arith.constant 0.000000e+00 : f32
    %81 = vector.broadcast %cst_59 : f32 to vector<16x128xf32>
    %82 = arith.select %53, %81, %80 : vector<16x128xi1>, vector<16x128xf32>
    %c0_60 = arith.constant 0 : index
    %c0_61 = arith.constant 0 : index
    %c0_62 = arith.constant 0 : index
    %83 = vector.load %arg8[%c0_60, %c0_61, %c0_62] : memref<3x128x128xf32, #tpu.memory_space<vmem>>, vector<1x128x128xf32>
    %84 = vector.shape_cast %83 : vector<1x128x128xf32> to vector<128x128xf32>
    %cst_63 = arith.constant dense<0.000000e+00> : vector<16x128xf32>
    %85 = tpu.matmul %79, %84, %cst_63 {dimension_numbers = #tpu.dot_dimension_numbers<[1], [0], [0], [1], [0, 0, 1, 1], [], []>} : vector<16x128xf32>, vector<128x128xf32>, vector<16x128xf32> -> vector<16x128xf32>
    %c1_64 = arith.constant 1 : index
    %c0_65 = arith.constant 0 : index
    %c0_66 = arith.constant 0 : index
    %86 = vector.load %arg8[%c1_64, %c0_65, %c0_66] : memref<3x128x128xf32, #tpu.memory_space<vmem>>, vector<1x128x128xf32>
    %87 = vector.shape_cast %86 : vector<1x128x128xf32> to vector<128x128xf32>
    %cst_67 = arith.constant dense<0.000000e+00> : vector<16x128xf32>
    %88 = tpu.matmul %76, %87, %cst_67 {dimension_numbers = #tpu.dot_dimension_numbers<[1], [0], [0], [1], [0, 0, 1, 1], [], []>} : vector<16x128xf32>, vector<128x128xf32>, vector<16x128xf32> -> vector<16x128xf32>
    %89 = arith.addf %85, %88 : vector<16x128xf32>
    %c2_68 = arith.constant 2 : index
    %c0_69 = arith.constant 0 : index
    %c0_70 = arith.constant 0 : index
    %90 = vector.load %arg8[%c2_68, %c0_69, %c0_70] : memref<3x128x128xf32, #tpu.memory_space<vmem>>, vector<1x128x128xf32>
    %91 = vector.shape_cast %90 : vector<1x128x128xf32> to vector<128x128xf32>
    %cst_71 = arith.constant dense<0.000000e+00> : vector<16x128xf32>
    %92 = tpu.matmul %82, %91, %cst_71 {dimension_numbers = #tpu.dot_dimension_numbers<[1], [0], [0], [1], [0, 0, 1, 1], [], []>} : vector<16x128xf32>, vector<128x128xf32>, vector<16x128xf32> -> vector<16x128xf32>
    %93 = arith.addf %89, %92 : vector<16x128xf32>
    %c0_72 = arith.constant 0 : index
    %c0_73 = arith.constant 0 : index
    %94 = vector.load %arg9[%c0_72, %c0_73] : memref<1x128xf32, #tpu.memory_space<vmem>>, vector<1x128xf32>
    %95 = vector.broadcast %94 : vector<1x128xf32> to vector<16x128xf32>
    %96 = arith.addf %93, %95 : vector<16x128xf32>
    %cst_74 = arith.constant 0.000000e+00 : f32
    %97 = vector.broadcast %cst_74 : f32 to vector<16x128xf32>
    %98 = arith.maximumf %96, %97 : vector<16x128xf32>
    %c1_i32_75 = arith.constant 1 : i32
    %99 = tpu.dynamic_rotate %98 by %c1_i32_75 dim 0 : vector<16x128xf32>, i32 -> vector<16x128xf32>
    %cst_76 = arith.constant 0.000000e+00 : f32
    %100 = vector.broadcast %cst_76 : f32 to vector<16x128xf32>
    %101 = arith.select %51, %100, %99 : vector<16x128xi1>, vector<16x128xf32>
    %c15_i32_77 = arith.constant 15 : i32
    %102 = tpu.dynamic_rotate %98 by %c15_i32_77 dim 0 : vector<16x128xf32>, i32 -> vector<16x128xf32>
    %cst_78 = arith.constant 0.000000e+00 : f32
    %103 = vector.broadcast %cst_78 : f32 to vector<16x128xf32>
    %104 = arith.select %53, %103, %102 : vector<16x128xi1>, vector<16x128xf32>
    %c0_79 = arith.constant 0 : index
    %c0_80 = arith.constant 0 : index
    %c0_81 = arith.constant 0 : index
    %105 = vector.load %arg10[%c0_79, %c0_80, %c0_81] : memref<3x128x128xf32, #tpu.memory_space<vmem>>, vector<1x128x128xf32>
    %106 = vector.shape_cast %105 : vector<1x128x128xf32> to vector<128x128xf32>
    %cst_82 = arith.constant dense<0.000000e+00> : vector<16x128xf32>
    %107 = tpu.matmul %101, %106, %cst_82 {dimension_numbers = #tpu.dot_dimension_numbers<[1], [0], [0], [1], [0, 0, 1, 1], [], []>} : vector<16x128xf32>, vector<128x128xf32>, vector<16x128xf32> -> vector<16x128xf32>
    %c1_83 = arith.constant 1 : index
    %c0_84 = arith.constant 0 : index
    %c0_85 = arith.constant 0 : index
    %108 = vector.load %arg10[%c1_83, %c0_84, %c0_85] : memref<3x128x128xf32, #tpu.memory_space<vmem>>, vector<1x128x128xf32>
    %109 = vector.shape_cast %108 : vector<1x128x128xf32> to vector<128x128xf32>
    %cst_86 = arith.constant dense<0.000000e+00> : vector<16x128xf32>
    %110 = tpu.matmul %98, %109, %cst_86 {dimension_numbers = #tpu.dot_dimension_numbers<[1], [0], [0], [1], [0, 0, 1, 1], [], []>} : vector<16x128xf32>, vector<128x128xf32>, vector<16x128xf32> -> vector<16x128xf32>
    %111 = arith.addf %107, %110 : vector<16x128xf32>
    %c2_87 = arith.constant 2 : index
    %c0_88 = arith.constant 0 : index
    %c0_89 = arith.constant 0 : index
    %112 = vector.load %arg10[%c2_87, %c0_88, %c0_89] : memref<3x128x128xf32, #tpu.memory_space<vmem>>, vector<1x128x128xf32>
    %113 = vector.shape_cast %112 : vector<1x128x128xf32> to vector<128x128xf32>
    %cst_90 = arith.constant dense<0.000000e+00> : vector<16x128xf32>
    %114 = tpu.matmul %104, %113, %cst_90 {dimension_numbers = #tpu.dot_dimension_numbers<[1], [0], [0], [1], [0, 0, 1, 1], [], []>} : vector<16x128xf32>, vector<128x128xf32>, vector<16x128xf32> -> vector<16x128xf32>
    %115 = arith.addf %111, %114 : vector<16x128xf32>
    %c0_91 = arith.constant 0 : index
    %c0_92 = arith.constant 0 : index
    %116 = vector.load %arg11[%c0_91, %c0_92] : memref<1x128xf32, #tpu.memory_space<vmem>>, vector<1x128xf32>
    %117 = vector.broadcast %116 : vector<1x128xf32> to vector<16x128xf32>
    %118 = arith.addf %115, %117 : vector<16x128xf32>
    %119 = arith.addf %118, %76 : vector<16x128xf32>
    %cst_93 = arith.constant 0.000000e+00 : f32
    %120 = vector.broadcast %cst_93 : f32 to vector<16x128xf32>
    %121 = arith.maximumf %119, %120 : vector<16x128xf32>
    %c0_94 = arith.constant 0 : index
    %c0_95 = arith.constant 0 : index
    %c0_96 = arith.constant 0 : index
    %122 = vector.load %arg12[%c0_94, %c0_95, %c0_96] : memref<1x16x128xf32, #tpu.memory_space<vmem>>, vector<1x16x128xf32>
    %123 = vector.shape_cast %122 : vector<1x16x128xf32> to vector<16x128xf32>
    %124 = vector.shape_cast %121 : vector<16x128xf32> to vector<1x16x128xf32>
    tpu.vector_store %arg12[%c0_94, %c0_95, %c0_96], %124 {strides = array<i32>} : memref<1x16x128xf32, #tpu.memory_space<vmem>>, vector<1x16x128xf32>,
    return
  }
  func.func @transform_0(%arg0: i32) -> (i32, i32, i32) {
    %c0_i32 = arith.constant 0 : i32
    %c0_i32_0 = arith.constant 0 : i32
    %c0_i32_1 = arith.constant 0 : i32
    return %arg0, %c0_i32, %c0_i32_0 : i32, i32, i32
  }
  func.func @transform_1(%arg0: i32) -> (i32, i32, i32) {
    %c0_i32 = arith.constant 0 : i32
    %c0_i32_0 = arith.constant 0 : i32
    %c0_i32_1 = arith.constant 0 : i32
    %c0_i32_2 = arith.constant 0 : i32
    return %c0_i32, %c0_i32_0, %c0_i32_1 : i32, i32, i32
  }
  func.func @transform_2(%arg0: i32) -> (i32, i32) {
    %c0_i32 = arith.constant 0 : i32
    %c0_i32_0 = arith.constant 0 : i32
    %c0_i32_1 = arith.constant 0 : i32
    return %c0_i32, %c0_i32_0 : i32, i32
  }
  func.func @transform_3(%arg0: i32) -> (i32, i32, i32) {
    %c0_i32 = arith.constant 0 : i32
    %c0_i32_0 = arith.constant 0 : i32
    %c0_i32_1 = arith.constant 0 : i32
    %c0_i32_2 = arith.constant 0 : i32
    return %c0_i32, %c0_i32_0, %c0_i32_1 : i32, i32, i32
  }
  func.func @transform_4(%arg0: i32) -> (i32, i32) {
    %c0_i32 = arith.constant 0 : i32
    %c0_i32_0 = arith.constant 0 : i32
    %c0_i32_1 = arith.constant 0 : i32
    return %c0_i32, %c0_i32_0 : i32, i32
  }
  func.func @transform_5(%arg0: i32) -> (i32, i32, i32) {
    %c0_i32 = arith.constant 0 : i32
    %c0_i32_0 = arith.constant 0 : i32
    %c0_i32_1 = arith.constant 0 : i32
    %c0_i32_2 = arith.constant 0 : i32
    return %c0_i32, %c0_i32_0, %c0_i32_1 : i32, i32, i32
  }
  func.func @transform_6(%arg0: i32) -> (i32, i32) {
    %c0_i32 = arith.constant 0 : i32
    %c0_i32_0 = arith.constant 0 : i32
    %c0_i32_1 = arith.constant 0 : i32
    return %c0_i32, %c0_i32_0 : i32, i32
  }
  func.func @transform_7(%arg0: i32) -> (i32, i32, i32) {
    %c0_i32 = arith.constant 0 : i32
    %c0_i32_0 = arith.constant 0 : i32
    %c0_i32_1 = arith.constant 0 : i32
    %c0_i32_2 = arith.constant 0 : i32
    return %c0_i32, %c0_i32_0, %c0_i32_1 : i32, i32, i32
  }
  func.func @transform_8(%arg0: i32) -> (i32, i32) {
    %c0_i32 = arith.constant 0 : i32
    %c0_i32_0 = arith.constant 0 : i32
    %c0_i32_1 = arith.constant 0 : i32
    return %c0_i32, %c0_i32_0 : i32, i32
  }
  func.func @transform_9(%arg0: i32) -> (i32, i32, i32) {
    %c0_i32 = arith.constant 0 : i32
    %c0_i32_0 = arith.constant 0 : i32
    %c0_i32_1 = arith.constant 0 : i32
    %c0_i32_2 = arith.constant 0 : i32
    return %c0_i32, %c0_i32_0, %c0_i32_1 : i32, i32, i32
  }
  func.func @transform_10(%arg0: i32) -> (i32, i32) {
    %c0_i32 = arith.constant 0 : i32
    %c0_i32_0 = arith.constant 0 : i32
    %c0_i32_1 = arith.constant 0 : i32
    return %c0_i32, %c0_i32_0 : i32, i32
  }
  func.func @transform_11(%arg0: i32) -> (i32, i32, i32) {
    %c0_i32 = arith.constant 0 : i32
    %c0_i32_0 = arith.constant 0 : i32
    %c0_i32_1 = arith.constant 0 : i32
    return %arg0, %c0_i32, %c0_i32_0 : i32, i32, i32
  }
}

</mosaic_0001>

<llo_original>
// kernel: tpu_custom_call.1
$region0: #{tpu_custom_call.1}
  #allocation0 [shape = 'u32[]', space=smem, size = 0x4, offset = 0x4, fixed_abs, tag = 'smem constant byte address 0x4 - core index']
  #allocation1 [shape = 'u32[144,128]{1,0:T(1,128)}', space=vmem, size = 0x12000, scoped, tag = 'internal scratch']
  %s0 = inlined_call_operand.hbm [shape: f32[2,16,64], index: 0, kind: input, shape index: {}]
  %s1 = inlined_call_operand.hbm [shape: f32[3,64,128], index: 1, kind: input, shape index: {}]
  %s2 = inlined_call_operand.vmem [shape: f32[1,128], index: 2, kind: input, shape index: {}]
  %s3 = inlined_call_operand.hbm [shape: f32[3,128,128], index: 3, kind: input, shape index: {}]
  %s4 = inlined_call_operand.vmem [shape: f32[1,128], index: 4, kind: input, shape index: {}]
  %s5 = inlined_call_operand.hbm [shape: f32[3,64,128], index: 5, kind: input, shape index: {}]
  %s6 = inlined_call_operand.vmem [shape: f32[1,128], index: 6, kind: input, shape index: {}]
  %s7 = inlined_call_operand.hbm [shape: f32[3,128,128], index: 7, kind: input, shape index: {}]
  %s8 = inlined_call_operand.vmem [shape: f32[1,128], index: 8, kind: input, shape index: {}]
  %s9 = inlined_call_operand.hbm [shape: f32[3,128,128], index: 9, kind: input, shape index: {}]
  %s10 = inlined_call_operand.vmem [shape: f32[1,128], index: 10, kind: input, shape index: {}]
  %s11 = inlined_call_operand.hbm [shape: f32[2,16,128], index: 11, kind: output, shape index: {}]
  %s12 = sld [smem:[#allocation0]]
  $region101: #{tpu_custom_call.1} parent=0
    _
  %s14 = ssub.s32 1, %s12
  %s15 = scalar_select 0, %s14, %s12
  $region1: #{tpu_custom_call.1} parent=0
    #allocation2 [shape = 'u8[16384]{0}', space=vmem, size = 0x4000, scoped, tag = 'input window, operand 0']
    #allocation3 [shape = 's32[2]{0}', space=sflag, size = 0x8, scoped, tag = 'scoped memory for tpu_custom_call.1']
    #allocation4 [shape = 's32[2]{0}', space=sflag, size = 0x8, scoped, tag = 'scoped memory for tpu_custom_call.1']
    #allocation5 [shape = 'u8[98304]{0}', space=vmem, size = 0x18000, scoped, tag = 'input window, operand 1, single buffered']
    #allocation6 [shape = 's32[1]{0}', space=sflag, size = 0x4, scoped, tag = 'scoped memory for tpu_custom_call.1']
    #allocation7 [shape = 'u8[196608]{0}', space=vmem, size = 0x30000, scoped, tag = 'input window, operand 3, single buffered']
    #allocation8 [shape = 'u8[98304]{0}', space=vmem, size = 0x18000, scoped, tag = 'input window, operand 5, single buffered']
    #allocation9 [shape = 's32[1]{0}', space=sflag, size = 0x4, scoped, tag = 'scoped memory for tpu_custom_call.1']
    #allocation10 [shape = 'u8[196608]{0}', space=vmem, size = 0x30000, scoped, tag = 'input window, operand 7, single buffered']
    #allocation11 [shape = 'u8[196608]{0}', space=vmem, size = 0x30000, scoped, tag = 'input window, operand 9, single buffered']
    #allocation12 [shape = 's32[1]{0}', space=sflag, size = 0x4, scoped, tag = 'scoped memory for tpu_custom_call.1']
    #allocation13 [shape = 'u8[16384]{0}', space=vmem, size = 0x4000, scoped, tag = 'output window, operand 0']
    %16 = vsyncpa [#allocation3], 0
    %s17 = scalar_lea.sflag [#allocation3], 1
    %18 = vsyncpa %s17, 0
    %19 = vsyncpa [#allocation6], 0
    %20 = vsyncpa [#allocation9], 0
    %21 = vsyncpa [#allocation12], 0
    %22 = vsyncpa [#allocation4], 0
    %s23 = scalar_lea.sflag [#allocation4], 1
    %24 = vsyncpa %s23, 0
    loop: start=0, step=1, limit=4
    $region2: #{tpu_custom_call.1} parent=1 // loop_pre_header
      _
    $region3: #{tpu_custom_call.1} parent=1 // loop_header
      %s26 = sphi 0, %s30
      %p27 = scmp.ge.s32.totalorder %s26, 4
      %s36 = sphi 0, %s38
      %s39 = sphi 0, %s36
      %s40 = sphi 0, %s39
      %s56 = sphi 0, %s40
      %s60 = sphi 0, %s60
      %s62 = sphi 0, %s60
      %s63 = sphi 0, %s62
      %s77 = sphi 0, %s63
      %s81 = sphi 0, %s81
      %s83 = sphi 0, %s81
      %s84 = sphi 0, %s83
      %s98 = sphi 0, %s84
      %s102 = sphi 0, %s102
      %s104 = sphi 0, %s102
      %s105 = sphi 0, %s104
      %s119 = sphi 0, %s105
      %s123 = sphi 0, %s123
      %s125 = sphi 0, %s123
      %s126 = sphi 0, %s125
      %s140 = sphi 0, %s126
      %s144 = sphi 0, %s144
      %s146 = sphi 0, %s144
      %s147 = sphi 0, %s146
      %s161 = sphi 0, %s147
      %s165 = sphi 0, %s165
      %s167 = sphi 0, %s165
      %s168 = sphi 0, %s167
      %s182 = sphi 0, %s168
      %s186 = sphi 0, %s186
      %s188 = sphi 0, %s186
      %s189 = sphi 0, %s188
      %s203 = sphi 0, %s189
      %s207 = sphi 0, %s207
      %s209 = sphi 0, %s207
      %s210 = sphi 0, %s209
      %s224 = sphi 0, %s210
      %s228 = sphi 0, %s228
      %s230 = sphi 0, %s228
      %s231 = sphi 0, %s230
      %s245 = sphi 0, %s231
      %s249 = sphi 0, %s249
      %s251 = sphi 0, %s249
      %s252 = sphi 0, %s251
      %s266 = sphi 0, %s252
      %s272 = sphi 0, %s274
      %s275 = sphi 0, %s272
      %s276 = sphi 0, %s275
      %s292 = sphi 0, %s276
    $region4: #{tpu_custom_call.1} parent=1 // loop_header_branch
      %29 = sbr.rel (%p27) target = $region8
    $region5: #{tpu_custom_call.1} parent=1 // loop_body
      %s31 = ssub.s32 %s26, 1
      %s32 = ssub.s32 %s26, 2
      %s33 = sadd.s32 %s26, 1
      %s34 = ssub.s32 %s26, %s33
      %p35 = scmp.eq.s32.totalorder %s34, 0
      %s37 = sadd.s32 %s36, 1
      %s38 = scalar_select %p35, %s36, %s37
      %p41 = pneg %p35
      %p42 = scmp.eq.s32.totalorder %s26, 1
      %p43 = por %p41, %p42
      %p44 = scmp.ne.s32.totalorder %s36, %s39
      %p45 = scmp.eq.s32.totalorder %s26, 0
      %p46 = por %p44, %p45
      %p47 = scmp.ne.s32.totalorder %s36, %s39
      %p48 = scmp.eq.s32.totalorder %s31, 1
      %p49 = por %p47, %p48
      %p50 = scmp.ne.s32.totalorder %s39, %s40
      %p51 = scmp.eq.s32.totalorder %s31, 0
      %p52 = por %p50, %p51
      %p53 = scmp.ne.s32.totalorder %s39, %s40
      %p54 = scmp.eq.s32.totalorder %s32, 1
      %p55 = por %p53, %p54
      %p57 = scmp.ne.s32.totalorder %s40, %s56
      %p58 = scmp.eq.s32.totalorder %s32, 0
      %p59 = por %p57, %p58
      %s61 = sadd.s32 %s60, 1
      %p64 = scmp.eq.s32.totalorder %s26, 1
      %p65 = scmp.ne.s32.totalorder %s60, %s62
      %p66 = scmp.eq.s32.totalorder %s26, 0
      %p67 = por %p65, %p66
      %p68 = scmp.ne.s32.totalorder %s60, %s62
      %p69 = scmp.eq.s32.totalorder %s31, 1
      %p70 = por %p68, %p69
      %p71 = scmp.ne.s32.totalorder %s62, %s63
      %p72 = scmp.eq.s32.totalorder %s31, 0
      %p73 = por %p71, %p72
      %p74 = scmp.ne.s32.totalorder %s62, %s63
      %p75 = scmp.eq.s32.totalorder %s32, 1
      %p76 = por %p74, %p75
      %p78 = scmp.ne.s32.totalorder %s63, %s77
      %p79 = scmp.eq.s32.totalorder %s32, 0
      %p80 = por %p78, %p79
      %s82 = sadd.s32 %s81, 1
      %p85 = scmp.eq.s32.totalorder %s26, 1
      %p86 = scmp.ne.s32.totalorder %s81, %s83
      %p87 = scmp.eq.s32.totalorder %s26, 0
      %p88 = por %p86, %p87
      %p89 = scmp.ne.s32.totalorder %s81, %s83
      %p90 = scmp.eq.s32.totalorder %s31, 1
      %p91 = por %p89, %p90
      %p92 = scmp.ne.s32.totalorder %s83, %s84
      %p93 = scmp.eq.s32.totalorder %s31, 0
      %p94 = por %p92, %p93
      %p95 = scmp.ne.s32.totalorder %s83, %s84
      %p96 = scmp.eq.s32.totalorder %s32, 1
      %p97 = por %p95, %p96
      %p99 = scmp.ne.s32.totalorder %s84, %s98
      %p100 = scmp.eq.s32.totalorder %s32, 0
      %p101 = por %p99, %p100
      %s103 = sadd.s32 %s102, 1
      %p106 = scmp.eq.s32.totalorder %s26, 1
      %p107 = scmp.ne.s32.totalorder %s102, %s104
      %p108 = scmp.eq.s32.totalorder %s26, 0
      %p109 = por %p107, %p108
      %p110 = scmp.ne.s32.totalorder %s102, %s104
      %p111 = scmp.eq.s32.totalorder %s31, 1
      %p112 = por %p110, %p111
      %p113 = scmp.ne.s32.totalorder %s104, %s105
      %p114 = scmp.eq.s32.totalorder %s31, 0
      %p115 = por %p113, %p114
      %p116 = scmp.ne.s32.totalorder %s104, %s105
      %p117 = scmp.eq.s32.totalorder %s32, 1
      %p118 = por %p116, %p117
      %p120 = scmp.ne.s32.totalorder %s105, %s119
      %p121 = scmp.eq.s32.totalorder %s32, 0
      %p122 = por %p120, %p121
      %s124 = sadd.s32 %s123, 1
      %p127 = scmp.eq.s32.totalorder %s26, 1
      %p128 = scmp.ne.s32.totalorder %s123, %s125
      %p129 = scmp.eq.s32.totalorder %s26, 0
      %p130 = por %p128, %p129
      %p131 = scmp.ne.s32.totalorder %s123, %s125
      %p132 = scmp.eq.s32.totalorder %s31, 1
      %p133 = por %p131, %p132
      %p134 = scmp.ne.s32.totalorder %s125, %s126
      %p135 = scmp.eq.s32.totalorder %s31, 0
      %p136 = por %p134, %p135
      %p137 = scmp.ne.s32.totalorder %s125, %s126
      %p138 = scmp.eq.s32.totalorder %s32, 1
      %p139 = por %p137, %p138
      %p141 = scmp.ne.s32.totalorder %s126, %s140
      %p142 = scmp.eq.s32.totalorder %s32, 0
      %p143 = por %p141, %p142
      %s145 = sadd.s32 %s144, 1
      %p148 = scmp.eq.s32.totalorder %s26, 1
      %p149 = scmp.ne.s32.totalorder %s144, %s146
      %p150 = scmp.eq.s32.totalorder %s26, 0
      %p151 = por %p149, %p150
      %p152 = scmp.ne.s32.totalorder %s144, %s146
      %p153 = scmp.eq.s32.totalorder %s31, 1
      %p154 = por %p152, %p153
      %p155 = scmp.ne.s32.totalorder %s146, %s147
      %p156 = scmp.eq.s32.totalorder %s31, 0
      %p157 = por %p155, %p156
      %p158 = scmp.ne.s32.totalorder %s146, %s147
      %p159 = scmp.eq.s32.totalorder %s32, 1
      %p160 = por %p158, %p159
      %p162 = scmp.ne.s32.totalorder %s147, %s161
      %p163 = scmp.eq.s32.totalorder %s32, 0
      %p164 = por %p162, %p163
      %s166 = sadd.s32 %s165, 1
      %p169 = scmp.eq.s32.totalorder %s26, 1
      %p170 = scmp.ne.s32.totalorder %s165, %s167
      %p171 = scmp.eq.s32.totalorder %s26, 0
      %p172 = por %p170, %p171
      %p173 = scmp.ne.s32.totalorder %s165, %s167
      %p174 = scmp.eq.s32.totalorder %s31, 1
      %p175 = por %p173, %p174
      %p176 = scmp.ne.s32.totalorder %s167, %s168
      %p177 = scmp.eq.s32.totalorder %s31, 0
      %p178 = por %p176, %p177
      %p179 = scmp.ne.s32.totalorder %s167, %s168
      %p180 = scmp.eq.s32.totalorder %s32, 1
      %p181 = por %p179, %p180
      %p183 = scmp.ne.s32.totalorder %s168, %s182
      %p184 = scmp.eq.s32.totalorder %s32, 0
      %p185 = por %p183, %p184
      %s187 = sadd.s32 %s186, 1
      %p190 = scmp.eq.s32.totalorder %s26, 1
      %p191 = scmp.ne.s32.totalorder %s186, %s188
      %p192 = scmp.eq.s32.totalorder %s26, 0
      %p193 = por %p191, %p192
      %p194 = scmp.ne.s32.totalorder %s186, %s188
      %p195 = scmp.eq.s32.totalorder %s31, 1
      %p196 = por %p194, %p195
      %p197 = scmp.ne.s32.totalorder %s188, %s189
      %p198 = scmp.eq.s32.totalorder %s31, 0
      %p199 = por %p197, %p198
      %p200 = scmp.ne.s32.totalorder %s188, %s189
      %p201 = scmp.eq.s32.totalorder %s32, 1
      %p202 = por %p200, %p201
      %p204 = scmp.ne.s32.totalorder %s189, %s203
      %p205 = scmp.eq.s32.totalorder %s32, 0
      %p206 = por %p204, %p205
      %s208 = sadd.s32 %s207, 1
      %p211 = scmp.eq.s32.totalorder %s26, 1
      %p212 = scmp.ne.s32.totalorder %s207, %s209
      %p213 = scmp.eq.s32.totalorder %s26, 0
      %p214 = por %p212, %p213
      %p215 = scmp.ne.s32.totalorder %s207, %s209
      %p216 = scmp.eq.s32.totalorder %s31, 1
      %p217 = por %p215, %p216
      %p218 = scmp.ne.s32.totalorder %s209, %s210
      %p219 = scmp.eq.s32.totalorder %s31, 0
      %p220 = por %p218, %p219
      %p221 = scmp.ne.s32.totalorder %s209, %s210
      %p222 = scmp.eq.s32.totalorder %s32, 1
      %p223 = por %p221, %p222
      %p225 = scmp.ne.s32.totalorder %s210, %s224
      %p226 = scmp.eq.s32.totalorder %s32, 0
      %p227 = por %p225, %p226
      %s229 = sadd.s32 %s228, 1
      %p232 = scmp.eq.s32.totalorder %s26, 1
      %p233 = scmp.ne.s32.totalorder %s228, %s230
      %p234 = scmp.eq.s32.totalorder %s26, 0
      %p235 = por %p233, %p234
      %p236 = scmp.ne.s32.totalorder %s228, %s230
      %p237 = scmp.eq.s32.totalorder %s31, 1
      %p238 = por %p236, %p237
      %p239 = scmp.ne.s32.totalorder %s230, %s231
      %p240 = scmp.eq.s32.totalorder %s31, 0
      %p241 = por %p239, %p240
      %p242 = scmp.ne.s32.totalorder %s230, %s231
      %p243 = scmp.eq.s32.totalorder %s32, 1
      %p244 = por %p242, %p243
      %p246 = scmp.ne.s32.totalorder %s231, %s245
      %p247 = scmp.eq.s32.totalorder %s32, 0
      %p248 = por %p246, %p247
      %s250 = sadd.s32 %s249, 1
      %p253 = scmp.eq.s32.totalorder %s26, 1
      %p254 = scmp.ne.s32.totalorder %s249, %s251
      %p255 = scmp.eq.s32.totalorder %s26, 0
      %p256 = por %p254, %p255
      %p257 = scmp.ne.s32.totalorder %s249, %s251
      %p258 = scmp.eq.s32.totalorder %s31, 1
      %p259 = por %p257, %p258
      %p260 = scmp.ne.s32.totalorder %s251, %s252
      %p261 = scmp.eq.s32.totalorder %s31, 0
      %p262 = por %p260, %p261
      %p263 = scmp.ne.s32.totalorder %s251, %s252
      %p264 = scmp.eq.s32.totalorder %s32, 1
      %p265 = por %p263, %p264
      %p267 = scmp.ne.s32.totalorder %s252, %s266
      %p268 = scmp.eq.s32.totalorder %s32, 0
      %p269 = por %p267, %p268
      %s270 = ssub.s32 %s26, %s33
      %p271 = scmp.eq.s32.totalorder %s270, 0
      %s273 = sadd.s32 %s272, 1
      %s274 = scalar_select %p271, %s272, %s273
      %p277 = pneg %p271
      %p278 = scmp.eq.s32.totalorder %s26, 1
      %p279 = por %p277, %p278
      %p280 = scmp.ne.s32.totalorder %s272, %s275
      %p281 = scmp.eq.s32.totalorder %s26, 0
      %p282 = por %p280, %p281
      %p283 = scmp.ne.s32.totalorder %s272, %s275
      %p284 = scmp.eq.s32.totalorder %s31, 1
      %p285 = por %p283, %p284
      %p286 = scmp.ne.s32.totalorder %s275, %s276
      %p287 = scmp.eq.s32.totalorder %s31, 0
      %p288 = por %p286, %p287
      %p289 = scmp.ne.s32.totalorder %s275, %s276
      %p290 = scmp.eq.s32.totalorder %s32, 1
      %p291 = por %p289, %p290
      %p293 = scmp.ne.s32.totalorder %s276, %s292
      %p294 = scmp.eq.s32.totalorder %s32, 0
      %p295 = por %p293, %p294
      %p296 = scmp.le.s32.totalorder 1, %s26
      %p297 = scmp.lt.s32.totalorder %s26, 3
      %p298 = pnand %p296, %p297
      %p299 = pneg %p298
      // Predicated region
      $region9: #{tpu_custom_call.1} parent=5 // pred_check
        _
      $region10: #{tpu_custom_call.1} parent=5 // pred_check_branch
        %301 = sbr.rel (%p298) target = $region12
      $region11: #{tpu_custom_call.1} parent=5 // pred_region
        %s302 = ssub.s32 %s26, 1
        // Predicated region
        $region13: #{tpu_custom_call.1} parent=11 // pred_check
          %p303 = pneg %p73
        $region14: #{tpu_custom_call.1} parent=11 // pred_check_branch
          %305 = sbr.rel (%p303) target = $region16
        $region15: #{tpu_custom_call.1} parent=11 // pred_region
          %s307 = ssub.s32 3072, 3072
          %308 = vsyncadd [#allocation6], %s307
          %s309 = sshll.u32 [#allocation5], 4
          %s310 = int_to_ptr.vmem [resolvable:$true] %s309
          %315 = dma.hbm_to_vmem [thread:$0]  %s1, 3072, %s310, [#allocation6], 128, 128, 8
        $region16: #{tpu_custom_call.1} parent=11 // pred_fallthru
          _
        // Predicated region
        $region17: #{tpu_custom_call.1} parent=11 // pred_check
          %p316 = pneg %p94
        $region18: #{tpu_custom_call.1} parent=11 // pred_check_branch
          %318 = sbr.rel (%p316) target = $region20
        $region19: #{tpu_custom_call.1} parent=11 // pred_region
          _
        $region20: #{tpu_custom_call.1} parent=11 // pred_fallthru
          _
        // Predicated region
        $region21: #{tpu_custom_call.1} parent=11 // pred_check
          %p319 = pneg %p115
        $region22: #{tpu_custom_call.1} parent=11 // pred_check_branch
          %321 = sbr.rel (%p319) target = $region24
        $region23: #{tpu_custom_call.1} parent=11 // pred_region
          %s323 = ssub.s32 6144, 6144
          %324 = vsyncadd [#allocation6], %s323
          %s325 = sshll.u32 [#allocation7], 4
          %s326 = int_to_ptr.vmem [resolvable:$true] %s325
          %331 = dma.hbm_to_vmem [thread:$0]  %s3, 6144, %s326, [#allocation6], 128, 128, 8
        $region24: #{tpu_custom_call.1} parent=11 // pred_fallthru
          _
        // Predicated region
        $region25: #{tpu_custom_call.1} parent=11 // pred_check
          %p332 = pneg %p136
        $region26: #{tpu_custom_call.1} parent=11 // pred_check_branch
          %334 = sbr.rel (%p332) target = $region28
        $region27: #{tpu_custom_call.1} parent=11 // pred_region
          _
        $region28: #{tpu_custom_call.1} parent=11 // pred_fallthru
          _
        // Predicated region
        $region29: #{tpu_custom_call.1} parent=11 // pred_check
          %p335 = pneg %p157
        $region30: #{tpu_custom_call.1} parent=11 // pred_check_branch
          %337 = sbr.rel (%p335) target = $region32
        $region31: #{tpu_custom_call.1} parent=11 // pred_region
          %s339 = ssub.s32 3072, 3072
          %340 = vsyncadd [#allocation9], %s339
          %s341 = sshll.u32 [#allocation8], 4
          %s342 = int_to_ptr.vmem [resolvable:$true] %s341
          %347 = dma.hbm_to_vmem [thread:$0]  %s5, 3072, %s342, [#allocation9], 128, 128, 8
        $region32: #{tpu_custom_call.1} parent=11 // pred_fallthru
          _
        // Predicated region
        $region33: #{tpu_custom_call.1} parent=11 // pred_check
          %p348 = pneg %p178
        $region34: #{tpu_custom_call.1} parent=11 // pred_check_branch
          %350 = sbr.rel (%p348) target = $region36
        $region35: #{tpu_custom_call.1} parent=11 // pred_region
          _
        $region36: #{tpu_custom_call.1} parent=11 // pred_fallthru
          _
        // Predicated region
        $region37: #{tpu_custom_call.1} parent=11 // pred_check
          %p351 = pneg %p199
        $region38: #{tpu_custom_call.1} parent=11 // pred_check_branch
          %353 = sbr.rel (%p351) target = $region40
        $region39: #{tpu_custom_call.1} parent=11 // pred_region
          %s355 = ssub.s32 6144, 6144
          %356 = vsyncadd [#allocation9], %s355
          %s357 = sshll.u32 [#allocation10], 4
          %s358 = int_to_ptr.vmem [resolvable:$true] %s357
          %363 = dma.hbm_to_vmem [thread:$0]  %s7, 6144, %s358, [#allocation9], 128, 128, 8
        $region40: #{tpu_custom_call.1} parent=11 // pred_fallthru
          _
        // Predicated region
        $region41: #{tpu_custom_call.1} parent=11 // pred_check
          %p364 = pneg %p220
        $region42: #{tpu_custom_call.1} parent=11 // pred_check_branch
          %366 = sbr.rel (%p364) target = $region44
        $region43: #{tpu_custom_call.1} parent=11 // pred_region
          _
        $region44: #{tpu_custom_call.1} parent=11 // pred_fallthru
          _
        // Predicated region
        $region45: #{tpu_custom_call.1} parent=11 // pred_check
          %p367 = pneg %p241
        $region46: #{tpu_custom_call.1} parent=11 // pred_check_branch
          %369 = sbr.rel (%p367) target = $region48
        $region47: #{tpu_custom_call.1} parent=11 // pred_region
          %s371 = ssub.s32 6144, 6144
          %372 = vsyncadd [#allocation12], %s371
          %s373 = sshll.u32 [#allocation11], 4
          %s374 = int_to_ptr.vmem [resolvable:$true] %s373
          %379 = dma.hbm_to_vmem [thread:$0]  %s9, 6144, %s374, [#allocation12], 128, 128, 8
        $region48: #{tpu_custom_call.1} parent=11 // pred_fallthru
          _
        // Predicated region
        $region49: #{tpu_custom_call.1} parent=11 // pred_check
          %p380 = pneg %p262
        $region50: #{tpu_custom_call.1} parent=11 // pred_check_branch
          %382 = sbr.rel (%p380) target = $region52
        $region51: #{tpu_custom_call.1} parent=11 // pred_region
          _
        $region52: #{tpu_custom_call.1} parent=11 // pred_fallthru
          _
      $region12: #{tpu_custom_call.1} parent=5 // pred_fallthru
        _
      %p383 = scmp.lt.s32.totalorder %s26, 2
      // Predicated region
      $region53: #{tpu_custom_call.1} parent=5 // pred_check
        %p384 = pneg %p383
      $region54: #{tpu_custom_call.1} parent=5 // pred_check_branch
        %386 = sbr.rel (%p384) target = $region56
      $region55: #{tpu_custom_call.1} parent=5 // pred_region
        // Predicated region
        $region57: #{tpu_custom_call.1} parent=55 // pred_check
          %p387 = pneg %p46
        $region58: #{tpu_custom_call.1} parent=55 // pred_check_branch
          %389 = sbr.rel (%p387) target = $region60
        $region59: #{tpu_custom_call.1} parent=55 // pred_region
          %s390 = sand.u32 %s36, 1
          %s391 = scalar_lea.sflag [#allocation3], %s390
          %s392 = sand.u32 %s36, 1
          %s393 = smul.addr %s392, 16
          %s394 = scalar_lea.vmem [#allocation2], %s393
          %s396 = ssub.s32 256, 256
          %397 = vsyncadd %s391, %s396
          %s398 = smul.addr %s26, 2
          %s399 = smul.addr %s398, 128
          %s400 = scalar_lea.hbm %s0, %s399
          %s401 = sshll.u32 %s394, 4
          %s402 = int_to_ptr.vmem [resolvable:$true] %s401
          %407 = dma.hbm_to_vmem [thread:$0]  %s400, 256, %s402, %s391, 128, 128, 8
        $region60: #{tpu_custom_call.1} parent=55 // pred_fallthru
          _
      $region56: #{tpu_custom_call.1} parent=5 // pred_fallthru
        _
      %p408 = scmp.le.s32.totalorder 1, %s26
      %p409 = scmp.lt.s32.totalorder %s26, 3
      %p410 = pnand %p408, %p409
      %p411 = pneg %p410
      // Predicated region
      $region61: #{tpu_custom_call.1} parent=5 // pred_check
        _
      $region62: #{tpu_custom_call.1} parent=5 // pred_check_branch
        %413 = sbr.rel (%p410) target = $region64
      $region63: #{tpu_custom_call.1} parent=5 // pred_region
        %s414 = ssub.s32 %s26, 1
        %s415 = sand.u32 %s39, 1
        %s416 = scalar_lea.sflag [#allocation3], %s415
        %s417 = sand.u32 %s39, 1
        %s418 = smul.addr %s417, 16
        %s419 = scalar_lea.vmem [#allocation2], %s418
        // Predicated region
        $region65: #{tpu_custom_call.1} parent=63 // pred_check
          %p420 = pneg %p52
        $region66: #{tpu_custom_call.1} parent=63 // pred_check_branch
          %422 = sbr.rel (%p420) target = $region68
        $region67: #{tpu_custom_call.1} parent=63 // pred_region
          %423 = dma.done %s416, 256
        $region68: #{tpu_custom_call.1} parent=63 // pred_fallthru
          _
        // Predicated region
        $region69: #{tpu_custom_call.1} parent=63 // pred_check
          %p424 = pneg %p73
        $region70: #{tpu_custom_call.1} parent=63 // pred_check_branch
          %426 = sbr.rel (%p424) target = $region72
        $region71: #{tpu_custom_call.1} parent=63 // pred_region
          %427 = dma.done [#allocation6], 3072
        $region72: #{tpu_custom_call.1} parent=63 // pred_fallthru
          _
        // Predicated region
        $region73: #{tpu_custom_call.1} parent=63 // pred_check
          %p428 = pneg %p115
        $region74: #{tpu_custom_call.1} parent=63 // pred_check_branch
          %430 = sbr.rel (%p428) target = $region76
        $region75: #{tpu_custom_call.1} parent=63 // pred_region
          %431 = dma.done [#allocation6], 6144
        $region76: #{tpu_custom_call.1} parent=63 // pred_fallthru
          _
        // Predicated region
        $region77: #{tpu_custom_call.1} parent=63 // pred_check
          %p432 = pneg %p157
        $region78: #{tpu_custom_call.1} parent=63 // pred_check_branch
          %434 = sbr.rel (%p432) target = $region80
        $region79: #{tpu_custom_call.1} parent=63 // pred_region
          %435 = dma.done [#allocation9], 3072
        $region80: #{tpu_custom_call.1} parent=63 // pred_fallthru
          _
        // Predicated region
        $region81: #{tpu_custom_call.1} parent=63 // pred_check
          %p436 = pneg %p199
        $region82: #{tpu_custom_call.1} parent=63 // pred_check_branch
          %438 = sbr.rel (%p436) target = $region84
        $region83: #{tpu_custom_call.1} parent=63 // pred_region
          %439 = dma.done [#allocation9], 6144
        $region84: #{tpu_custom_call.1} parent=63 // pred_fallthru
          _
        // Predicated region
        $region85: #{tpu_custom_call.1} parent=63 // pred_check
          %p440 = pneg %p241
        $region86: #{tpu_custom_call.1} parent=63 // pred_check_branch
          %442 = sbr.rel (%p440) target = $region88
        $region87: #{tpu_custom_call.1} parent=63 // pred_region
          %443 = dma.done [#allocation12], 6144
        $region88: #{tpu_custom_call.1} parent=63 // pred_fallthru
          _
        %s444 = sand.u32 %s39, 1
        %s445 = scalar_lea.sflag [#allocation3], %s444
        %s446 = sand.u32 %s39, 1
        %s447 = smul.addr %s446, 16
        %s448 = scalar_lea.vmem [#allocation2], %s447
        %p449 = pneg %p52
        %p450 = pneg %p49
        %p451 = pneg %p73
        %p452 = pneg %p70
        %p453 = pneg %p94
        %p454 = pneg %p91
        %p455 = pneg %p115
        %p456 = pneg %p112
        %p457 = pneg %p136
        %p458 = pneg %p133
        %p459 = pneg %p157
        %p460 = pneg %p154
        %p461 = pneg %p178
        %p462 = pneg %p175
        %p463 = pneg %p199
        %p464 = pneg %p196
        %p465 = pneg %p220
        %p466 = pneg %p217
        %p467 = pneg %p241
        %p468 = pneg %p238
        %p469 = pneg %p262
        %p470 = pneg %p259
        %p471 = pneg %p288
        %p472 = pneg %p285
        %s473 = sand.u32 %s275, 1
        %s474 = scalar_lea.sflag [#allocation4], %s473
        %s475 = sand.u32 %s275, 1
        %s476 = smul.addr %s475, 16
        %s477 = scalar_lea.vmem [#allocation13], %s476
        %v478 = vld [vmem:[%s419] sm:$0xff]
        %v479 = vld [vmem:[%s419 + $0x8] sm:$0xff]
        %v480 = vlaneseq
        %v481 = vshrl.u32 %v480, 7
        %v482 = vadd.s32 %v481, 8
        %vm483 = vcmp.eq.s32.totalorder %v481, 0
        %vm484 = vcmp.eq.s32.totalorder %v482, 0
        %vm485 = vcmp.eq.s32.totalorder %v481, 15
        %vm486 = vcmp.eq.s32.totalorder %v482, 15
        %v487 = vrot.slane %v478, 7
        %v488 = vrot.slane %v479, 7
        %vm489 = vcmp.lt.s32.totalorder %v481, 1
        %v490 = vsel %vm489, %v487, %v488
        %v491 = vsel %vm489, %v488, %v487
        %v492 = vsel %vm483, 0.0, %v491
        %v493 = vsel %vm484, 0.0, %v490
        %v494 = vrot.slane %v478, 1
        %v495 = vrot.slane %v479, 1
        %vm496 = vcmp.lt.s32.totalorder %v481, 7
        %v497 = vsel %vm496, %v494, %v495
        %v498 = vsel %vm496, %v495, %v494
        %v499 = vsel %vm485, 0.0, %v497
        %v500 = vsel %vm486, 0.0, %v498
        %v501 = vld [vmem:[#allocation5] sm:$0xff]
        %v502 = vld [vmem:[#allocation5 + $0x8] sm:$0xff]
        %v503 = vld [vmem:[#allocation5 + $0x10] sm:$0xff]
        %v504 = vld [vmem:[#allocation5 + $0x18] sm:$0xff]
        %v505 = vld [vmem:[#allocation5 + $0x20] sm:$0xff]
        %v506 = vld [vmem:[#allocation5 + $0x28] sm:$0xff]
        %v507 = vld [vmem:[#allocation5 + $0x30] sm:$0xff]
        %v508 = vld [vmem:[#allocation5 + $0x38] sm:$0xff]
        %s509 = scalar_lea.vmem [#allocation5], 64
        %v510 = vld [vmem:[%s509] sm:$0xff]
        %v511 = vld [vmem:[%s509 + $0x8] sm:$0xff]
        %v512 = vld [vmem:[%s509 + $0x10] sm:$0xff]
        %v513 = vld [vmem:[%s509 + $0x18] sm:$0xff]
        %v514 = vld [vmem:[%s509 + $0x20] sm:$0xff]
        %v515 = vld [vmem:[%s509 + $0x28] sm:$0xff]
        %v516 = vld [vmem:[%s509 + $0x30] sm:$0xff]
        %v517 = vld [vmem:[%s509 + $0x38] sm:$0xff]
        %vm518 = vcmask 523264
        %v520 = vsel %vm518, %v478, 0
        %v523 = vsel %vm518, %v479, 0
        %525 = vmatprep.subr.mxu0 0.0
        %526 = vmatpush1.msra.mxu0 %v510
        %527 = vmatprep.subr.mxu0 0.0
        %528 = vmatpush1.msra.mxu0 %v511
        %529 = vmatprep.subr.mxu0 0.0
        %530 = vmatpush1.msra.mxu0 %v512
        %531 = vmatprep.subr.mxu0 0.0
        %532 = vmatpush1.msra.mxu0 %v513
        %533 = vmatprep.subr.mxu0 0.0
        %534 = vmatpush1.msra.mxu0 %v514
        %535 = vmatprep.subr.mxu0 0.0
        %536 = vmatpush1.msra.mxu0 %v515
        %537 = vmatprep.subr.mxu0 0.0
        %538 = vmatpush1.msra.mxu0 %v516
        %539 = vmatprep.subr.mxu0 0.0
        %540 = vmatpush1.msra.mxu0 %v517
        %541 = vmatprep.subr.mxu0 0.0
        %542 = vmatpush1.msra.mxu0 0.0
        %543 = vmatprep.subr.mxu0 0.0
        %544 = vmatpush1.msra.mxu0 0.0
        %545 = vmatprep.subr.mxu0 0.0
        %546 = vmatpush1.msra.mxu0 0.0
        %547 = vmatprep.subr.mxu0 0.0
        %548 = vmatpush1.msra.mxu0 0.0
        %549 = vmatprep.subr.mxu0 0.0
        %550 = vmatpush1.msra.mxu0 0.0
        %551 = vmatprep.subr.mxu0 0.0
        %552 = vmatpush1.msra.mxu0 0.0
        %553 = vmatprep.subr.mxu0 0.0
        %554 = vmatpush1.msra.mxu0 0.0
        %555 = vmatprep.subr.mxu0 0.0
        %556 = vmatpush1.msra.mxu0 0.0
        %557 = vmatprep.subr.mxu0 0.0
        %558 = vmatpush1.msra.mxu0 0.0
        %559 = vmatprep.subr.mxu0 0.0
        %560 = vmatpush1.msra.mxu0 0.0
        %561 = vmatprep.subr.mxu0 0.0
        %562 = vmatpush1.msra.mxu0 0.0
        %563 = vmatprep.subr.mxu0 0.0
        %564 = vmatpush1.msra.mxu0 0.0
        %565 = vmatprep.subr.mxu0 0.0
        %566 = vmatpush1.msra.mxu0 0.0
        %567 = vmatprep.subr.mxu0 0.0
        %568 = vmatpush1.msra.mxu0 0.0
        %569 = vmatprep.subr.mxu0 0.0
        %570 = vmatpush1.msra.mxu0 0.0
        %571 = vmatprep.subr.mxu0 0.0
        %572 = vmatpush1.msra.mxu0 0.0
        %573 = vmatprep.subr.mxu0 0.0
        %574 = vmatpush1.msra.mxu0 0.0
        %575 = vmatprep.subr.mxu0 0.0
        %576 = vmatpush1.msra.mxu0 0.0
        %577 = vmatprep.subr.mxu0 0.0
        %578 = vmatpush1.msra.mxu0 0.0
        %579 = vmatprep.subr.mxu0 0.0
        %580 = vmatpush1.msra.mxu0 0.0
        %581 = vmatprep.subr.mxu0 0.0
        %582 = vmatpush1.msra.mxu0 0.0
        %583 = vmatprep.subr.mxu0 0.0
        %584 = vmatpush1.msra.mxu0 0.0
        %585 = vmatprep.subr.mxu0 0.0
        %586 = vmatpush1.msra.mxu0 0.0
        %587 = vmatprep.subr.mxu0 0.0
        %588 = vmatpush1.msra.mxu0 0.0
        %589 = vmatprep.mubr.f32.mxu0 0.0
        %590 = vmatmul.mubr.f32.gmra.mrb[0].mxu0 %v520
        %v591 = vpop.f32.mrb[0].mxu0
        %v592 = vadd.f32 0.0, %v591
        %v593 = vpop.f32.mrb[0].mxu0
        %594 = vmatprep.mubr.f32.mxu0 0.0
        %595 = vmatmul.mubr.f32.gmra.mrb[0].mxu0 %v523
        %v596 = vpop.f32.mrb[0].mxu0
        %v597 = vadd.f32 0.0, %v596
        %v598 = vpop.f32.mrb[0].mxu0
        %599 = vdwg.mxu0
        %v601 = vsel %vm518, %v492, 0
        %v604 = vsel %vm518, %v493, 0
        %606 = vmatprep.subr.mxu0 0.0
        %607 = vmatpush1.msra.mxu0 %v501
        %608 = vmatprep.subr.mxu0 0.0
        %609 = vmatpush1.msra.mxu0 %v502
        %610 = vmatprep.subr.mxu0 0.0
        %611 = vmatpush1.msra.mxu0 %v503
        %612 = vmatprep.subr.mxu0 0.0
        %613 = vmatpush1.msra.mxu0 %v504
        %614 = vmatprep.subr.mxu0 0.0
        %615 = vmatpush1.msra.mxu0 %v505
        %616 = vmatprep.subr.mxu0 0.0
        %617 = vmatpush1.msra.mxu0 %v506
        %618 = vmatprep.subr.mxu0 0.0
        %619 = vmatpush1.msra.mxu0 %v507
        %620 = vmatprep.subr.mxu0 0.0
        %621 = vmatpush1.msra.mxu0 %v508
        %622 = vmatprep.subr.mxu0 0.0
        %623 = vmatpush1.msra.mxu0 0.0
        %624 = vmatprep.subr.mxu0 0.0
        %625 = vmatpush1.msra.mxu0 0.0
        %626 = vmatprep.subr.mxu0 0.0
        %627 = vmatpush1.msra.mxu0 0.0
        %628 = vmatprep.subr.mxu0 0.0
        %629 = vmatpush1.msra.mxu0 0.0
        %630 = vmatprep.subr.mxu0 0.0
        %631 = vmatpush1.msra.mxu0 0.0
        %632 = vmatprep.subr.mxu0 0.0
        %633 = vmatpush1.msra.mxu0 0.0
        %634 = vmatprep.subr.mxu0 0.0
        %635 = vmatpush1.msra.mxu0 0.0
        %636 = vmatprep.subr.mxu0 0.0
        %637 = vmatpush1.msra.mxu0 0.0
        %638 = vmatprep.subr.mxu0 0.0
        %639 = vmatpush1.msra.mxu0 0.0
        %640 = vmatprep.subr.mxu0 0.0
        %641 = vmatpush1.msra.mxu0 0.0
        %642 = vmatprep.subr.mxu0 0.0
        %643 = vmatpush1.msra.mxu0 0.0
        %644 = vmatprep.subr.mxu0 0.0
        %645 = vmatpush1.msra.mxu0 0.0
        %646 = vmatprep.subr.mxu0 0.0
        %647 = vmatpush1.msra.mxu0 0.0
        %648 = vmatprep.subr.mxu0 0.0
        %649 = vmatpush1.msra.mxu0 0.0
        %650 = vmatprep.subr.mxu0 0.0
        %651 = vmatpush1.msra.mxu0 0.0
        %652 = vmatprep.subr.mxu0 0.0
        %653 = vmatpush1.msra.mxu0 0.0
        %654 = vmatprep.subr.mxu0 0.0
        %655 = vmatpush1.msra.mxu0 0.0
        %656 = vmatprep.subr.mxu0 0.0
        %657 = vmatpush1.msra.mxu0 0.0
        %658 = vmatprep.subr.mxu0 0.0
        %659 = vmatpush1.msra.mxu0 0.0
        %660 = vmatprep.subr.mxu0 0.0
        %661 = vmatpush1.msra.mxu0 0.0
        %662 = vmatprep.subr.mxu0 0.0
        %663 = vmatpush1.msra.mxu0 0.0
        %664 = vmatprep.subr.mxu0 0.0
        %665 = vmatpush1.msra.mxu0 0.0
        %666 = vmatprep.subr.mxu0 0.0
        %667 = vmatpush1.msra.mxu0 0.0
        %668 = vmatprep.subr.mxu0 0.0
        %669 = vmatpush1.msra.mxu0 0.0
        %670 = vmatprep.mubr.f32.mxu0 0.0
        %671 = vmatmul.mubr.f32.gmra.mrb[0].mxu0 %v601
        %v672 = vpop.f32.mrb[0].mxu0
        %v673 = vadd.f32 %v592, %v672
        %v674 = vpop.f32.mrb[0].mxu0
        %675 = vmatprep.mubr.f32.mxu0 0.0
        %676 = vmatmul.mubr.f32.gmra.mrb[0].mxu0 %v604
        %v677 = vpop.f32.mrb[0].mxu0
        %v678 = vadd.f32 %v597, %v677
        %v679 = vpop.f32.mrb[0].mxu0
        %680 = vdwg.mxu0
        %s681 = scalar_lea.vmem [#allocation5], 128
        %v682 = vld [vmem:[%s681] sm:$0xff]
        %v683 = vld [vmem:[%s681 + $0x8] sm:$0xff]
        %v684 = vld [vmem:[%s681 + $0x10] sm:$0xff]
        %v685 = vld [vmem:[%s681 + $0x18] sm:$0xff]
        %v686 = vld [vmem:[%s681 + $0x20] sm:$0xff]
        %v687 = vld [vmem:[%s681 + $0x28] sm:$0xff]
        %v688 = vld [vmem:[%s681 + $0x30] sm:$0xff]
        %v689 = vld [vmem:[%s681 + $0x38] sm:$0xff]
        %v691 = vsel %vm518, %v499, 0
        %v694 = vsel %vm518, %v500, 0
        %696 = vmatprep.subr.mxu0 0.0
        %697 = vmatpush1.msra.mxu0 %v682
        %698 = vmatprep.subr.mxu0 0.0
        %699 = vmatpush1.msra.mxu0 %v683
        %700 = vmatprep.subr.mxu0 0.0
        %701 = vmatpush1.msra.mxu0 %v684
        %702 = vmatprep.subr.mxu0 0.0
        %703 = vmatpush1.msra.mxu0 %v685
        %704 = vmatprep.subr.mxu0 0.0
        %705 = vmatpush1.msra.mxu0 %v686
        %706 = vmatprep.subr.mxu0 0.0
        %707 = vmatpush1.msra.mxu0 %v687
        %708 = vmatprep.subr.mxu0 0.0
        %709 = vmatpush1.msra.mxu0 %v688
        %710 = vmatprep.subr.mxu0 0.0
        %711 = vmatpush1.msra.mxu0 %v689
        %712 = vmatprep.subr.mxu0 0.0
        %713 = vmatpush1.msra.mxu0 0.0
        %714 = vmatprep.subr.mxu0 0.0
        %715 = vmatpush1.msra.mxu0 0.0
        %716 = vmatprep.subr.mxu0 0.0
        %717 = vmatpush1.msra.mxu0 0.0
        %718 = vmatprep.subr.mxu0 0.0
        %719 = vmatpush1.msra.mxu0 0.0
        %720 = vmatprep.subr.mxu0 0.0
        %721 = vmatpush1.msra.mxu0 0.0
        %722 = vmatprep.subr.mxu0 0.0
        %723 = vmatpush1.msra.mxu0 0.0
        %724 = vmatprep.subr.mxu0 0.0
        %725 = vmatpush1.msra.mxu0 0.0
        %726 = vmatprep.subr.mxu0 0.0
        %727 = vmatpush1.msra.mxu0 0.0
        %728 = vmatprep.subr.mxu0 0.0
        %729 = vmatpush1.msra.mxu0 0.0
        %730 = vmatprep.subr.mxu0 0.0
        %731 = vmatpush1.msra.mxu0 0.0
        %732 = vmatprep.subr.mxu0 0.0
        %733 = vmatpush1.msra.mxu0 0.0
        %734 = vmatprep.subr.mxu0 0.0
        %735 = vmatpush1.msra.mxu0 0.0
        %736 = vmatprep.subr.mxu0 0.0
        %737 = vmatpush1.msra.mxu0 0.0
        %738 = vmatprep.subr.mxu0 0.0
        %739 = vmatpush1.msra.mxu0 0.0
        %740 = vmatprep.subr.mxu0 0.0
        %741 = vmatpush1.msra.mxu0 0.0
        %742 = vmatprep.subr.mxu0 0.0
        %743 = vmatpush1.msra.mxu0 0.0
        %744 = vmatprep.subr.mxu0 0.0
        %745 = vmatpush1.msra.mxu0 0.0
        %746 = vmatprep.subr.mxu0 0.0
        %747 = vmatpush1.msra.mxu0 0.0
        %748 = vmatprep.subr.mxu0 0.0
        %749 = vmatpush1.msra.mxu0 0.0
        %750 = vmatprep.subr.mxu0 0.0
        %751 = vmatpush1.msra.mxu0 0.0
        %752 = vmatprep.subr.mxu0 0.0
        %753 = vmatpush1.msra.mxu0 0.0
        %754 = vmatprep.subr.mxu0 0.0
        %755 = vmatpush1.msra.mxu0 0.0
        %756 = vmatprep.subr.mxu0 0.0
        %757 = vmatpush1.msra.mxu0 0.0
        %758 = vmatprep.subr.mxu0 0.0
        %759 = vmatpush1.msra.mxu0 0.0
        %760 = vmatprep.mubr.f32.mxu0 0.0
        %761 = vmatmul.mubr.f32.gmra.mrb[0].mxu0 %v691
        %v762 = vpop.f32.mrb[0].mxu0
        %v763 = vadd.f32 0.0, %v762
        %v764 = vpop.f32.mrb[0].mxu0
        %765 = vmatprep.mubr.f32.mxu0 0.0
        %766 = vmatmul.mubr.f32.gmra.mrb[0].mxu0 %v694
        %v767 = vpop.f32.mrb[0].mxu0
        %v768 = vadd.f32 0.0, %v767
        %v769 = vpop.f32.mrb[0].mxu0
        %770 = vdwg.mxu0
        %v771 = vadd.f32 %v673, %v763
        %v772 = vadd.f32 %v678, %v768
        %v773 = vld [vmem:[%s2] sm:$0x1]
        %v775 = vlaneseq
        %v776 = vshrl.u32 %v775, 7
        %v777 = vsub.s32 0, %v776
        %v778 = vrot.slane %v773, %v777
        %v780 = vadd.f32 %v771, %v778
        %v781 = vadd.f32 %v772, %v778
        %v782 = vmax.f32 %v780, 0.0
        %v783 = vmax.f32 %v781, 0.0
        %v784 = vld [vmem:[#allocation8] sm:$0xff]
        %v785 = vld [vmem:[#allocation8 + $0x8] sm:$0xff]
        %v786 = vld [vmem:[#allocation8 + $0x10] sm:$0xff]
        %v787 = vld [vmem:[#allocation8 + $0x18] sm:$0xff]
        %v788 = vld [vmem:[#allocation8 + $0x20] sm:$0xff]
        %v789 = vld [vmem:[#allocation8 + $0x28] sm:$0xff]
        %v790 = vld [vmem:[#allocation8 + $0x30] sm:$0xff]
        %v791 = vld [vmem:[#allocation8 + $0x38] sm:$0xff]
        %s792 = scalar_lea.vmem [#allocation8], 64
        %v793 = vld [vmem:[%s792] sm:$0xff]
        %v794 = vld [vmem:[%s792 + $0x8] sm:$0xff]
        %v795 = vld [vmem:[%s792 + $0x10] sm:$0xff]
        %v796 = vld [vmem:[%s792 + $0x18] sm:$0xff]
        %v797 = vld [vmem:[%s792 + $0x20] sm:$0xff]
        %v798 = vld [vmem:[%s792 + $0x28] sm:$0xff]
        %v799 = vld [vmem:[%s792 + $0x30] sm:$0xff]
        %v800 = vld [vmem:[%s792 + $0x38] sm:$0xff]
        %801 = vmatprep.subr.mxu0 0.0
        %802 = vmatpush1.msra.mxu0 %v793
        %803 = vmatprep.subr.mxu0 0.0
        %804 = vmatpush1.msra.mxu0 %v794
        %805 = vmatprep.subr.mxu0 0.0
        %806 = vmatpush1.msra.mxu0 %v795
        %807 = vmatprep.subr.mxu0 0.0
        %808 = vmatpush1.msra.mxu0 %v796
        %809 = vmatprep.subr.mxu0 0.0
        %810 = vmatpush1.msra.mxu0 %v797
        %811 = vmatprep.subr.mxu0 0.0
        %812 = vmatpush1.msra.mxu0 %v798
        %813 = vmatprep.subr.mxu0 0.0
        %814 = vmatpush1.msra.mxu0 %v799
        %815 = vmatprep.subr.mxu0 0.0
        %816 = vmatpush1.msra.mxu0 %v800
        %817 = vmatprep.subr.mxu0 0.0
        %818 = vmatpush1.msra.mxu0 0.0
        %819 = vmatprep.subr.mxu0 0.0
        %820 = vmatpush1.msra.mxu0 0.0
        %821 = vmatprep.subr.mxu0 0.0
        %822 = vmatpush1.msra.mxu0 0.0
        %823 = vmatprep.subr.mxu0 0.0
        %824 = vmatpush1.msra.mxu0 0.0
        %825 = vmatprep.subr.mxu0 0.0
        %826 = vmatpush1.msra.mxu0 0.0
        %827 = vmatprep.subr.mxu0 0.0
        %828 = vmatpush1.msra.mxu0 0.0
        %829 = vmatprep.subr.mxu0 0.0
        %830 = vmatpush1.msra.mxu0 0.0
        %831 = vmatprep.subr.mxu0 0.0
        %832 = vmatpush1.msra.mxu0 0.0
        %833 = vmatprep.subr.mxu0 0.0
        %834 = vmatpush1.msra.mxu0 0.0
        %835 = vmatprep.subr.mxu0 0.0
        %836 = vmatpush1.msra.mxu0 0.0
        %837 = vmatprep.subr.mxu0 0.0
        %838 = vmatpush1.msra.mxu0 0.0
        %839 = vmatprep.subr.mxu0 0.0
        %840 = vmatpush1.msra.mxu0 0.0
        %841 = vmatprep.subr.mxu0 0.0
        %842 = vmatpush1.msra.mxu0 0.0
        %843 = vmatprep.subr.mxu0 0.0
        %844 = vmatpush1.msra.mxu0 0.0
        %845 = vmatprep.subr.mxu0 0.0
        %846 = vmatpush1.msra.mxu0 0.0
        %847 = vmatprep.subr.mxu0 0.0
        %848 = vmatpush1.msra.mxu0 0.0
        %849 = vmatprep.subr.mxu0 0.0
        %850 = vmatpush1.msra.mxu0 0.0
        %851 = vmatprep.subr.mxu0 0.0
        %852 = vmatpush1.msra.mxu0 0.0
        %853 = vmatprep.subr.mxu0 0.0
        %854 = vmatpush1.msra.mxu0 0.0
        %855 = vmatprep.subr.mxu0 0.0
        %856 = vmatpush1.msra.mxu0 0.0
        %857 = vmatprep.subr.mxu0 0.0
        %858 = vmatpush1.msra.mxu0 0.0
        %859 = vmatprep.subr.mxu0 0.0
        %860 = vmatpush1.msra.mxu0 0.0
        %861 = vmatprep.subr.mxu0 0.0
        %862 = vmatpush1.msra.mxu0 0.0
        %863 = vmatprep.subr.mxu0 0.0
        %864 = vmatpush1.msra.mxu0 0.0
        %865 = vmatprep.mubr.f32.mxu0 0.0
        %866 = vmatmul.mubr.f32.gmra.mrb[0].mxu0 %v520
        %v867 = vpop.f32.mrb[0].mxu0
        %v868 = vadd.f32 0.0, %v867
        %v869 = vpop.f32.mrb[0].mxu0
        %870 = vmatprep.mubr.f32.mxu0 0.0
        %871 = vmatmul.mubr.f32.gmra.mrb[0].mxu0 %v523
        %v872 = vpop.f32.mrb[0].mxu0
        %v873 = vadd.f32 0.0, %v872
        %v874 = vpop.f32.mrb[0].mxu0
        %875 = vdwg.mxu0
        %876 = vmatprep.subr.mxu0 0.0
        %877 = vmatpush1.msra.mxu0 %v784
        %878 = vmatprep.subr.mxu0 0.0
        %879 = vmatpush1.msra.mxu0 %v785
        %880 = vmatprep.subr.mxu0 0.0
        %881 = vmatpush1.msra.mxu0 %v786
        %882 = vmatprep.subr.mxu0 0.0
        %883 = vmatpush1.msra.mxu0 %v787
        %884 = vmatprep.subr.mxu0 0.0
        %885 = vmatpush1.msra.mxu0 %v788
        %886 = vmatprep.subr.mxu0 0.0
        %887 = vmatpush1.msra.mxu0 %v789
        %888 = vmatprep.subr.mxu0 0.0
        %889 = vmatpush1.msra.mxu0 %v790
        %890 = vmatprep.subr.mxu0 0.0
        %891 = vmatpush1.msra.mxu0 %v791
        %892 = vmatprep.subr.mxu0 0.0
        %893 = vmatpush1.msra.mxu0 0.0
        %894 = vmatprep.subr.mxu0 0.0
        %895 = vmatpush1.msra.mxu0 0.0
        %896 = vmatprep.subr.mxu0 0.0
        %897 = vmatpush1.msra.mxu0 0.0
        %898 = vmatprep.subr.mxu0 0.0
        %899 = vmatpush1.msra.mxu0 0.0
        %900 = vmatprep.subr.mxu0 0.0
        %901 = vmatpush1.msra.mxu0 0.0
        %902 = vmatprep.subr.mxu0 0.0
        %903 = vmatpush1.msra.mxu0 0.0
        %904 = vmatprep.subr.mxu0 0.0
        %905 = vmatpush1.msra.mxu0 0.0
        %906 = vmatprep.subr.mxu0 0.0
        %907 = vmatpush1.msra.mxu0 0.0
        %908 = vmatprep.subr.mxu0 0.0
        %909 = vmatpush1.msra.mxu0 0.0
        %910 = vmatprep.subr.mxu0 0.0
        %911 = vmatpush1.msra.mxu0 0.0
        %912 = vmatprep.subr.mxu0 0.0
        %913 = vmatpush1.msra.mxu0 0.0
        %914 = vmatprep.subr.mxu0 0.0
        %915 = vmatpush1.msra.mxu0 0.0
        %916 = vmatprep.subr.mxu0 0.0
        %917 = vmatpush1.msra.mxu0 0.0
        %918 = vmatprep.subr.mxu0 0.0
        %919 = vmatpush1.msra.mxu0 0.0
        %920 = vmatprep.subr.mxu0 0.0
        %921 = vmatpush1.msra.mxu0 0.0
        %922 = vmatprep.subr.mxu0 0.0
        %923 = vmatpush1.msra.mxu0 0.0
        %924 = vmatprep.subr.mxu0 0.0
        %925 = vmatpush1.msra.mxu0 0.0
        %926 = vmatprep.subr.mxu0 0.0
        %927 = vmatpush1.msra.mxu0 0.0
        %928 = vmatprep.subr.mxu0 0.0
        %929 = vmatpush1.msra.mxu0 0.0
        %930 = vmatprep.subr.mxu0 0.0
        %931 = vmatpush1.msra.mxu0 0.0
        %932 = vmatprep.subr.mxu0 0.0
        %933 = vmatpush1.msra.mxu0 0.0
        %934 = vmatprep.subr.mxu0 0.0
        %935 = vmatpush1.msra.mxu0 0.0
        %936 = vmatprep.subr.mxu0 0.0
        %937 = vmatpush1.msra.mxu0 0.0
        %938 = vmatprep.subr.mxu0 0.0
        %939 = vmatpush1.msra.mxu0 0.0
        %940 = vmatprep.mubr.f32.mxu0 0.0
        %941 = vmatmul.mubr.f32.gmra.mrb[0].mxu0 %v601
        %v942 = vpop.f32.mrb[0].mxu0
        %v943 = vadd.f32 %v868, %v942
        %v944 = vpop.f32.mrb[0].mxu0
        %945 = vmatprep.mubr.f32.mxu0 0.0
        %946 = vmatmul.mubr.f32.gmra.mrb[0].mxu0 %v604
        %v947 = vpop.f32.mrb[0].mxu0
        %v948 = vadd.f32 %v873, %v947
        %v949 = vpop.f32.mrb[0].mxu0
        %950 = vdwg.mxu0
        %s951 = scalar_lea.vmem [#allocation8], 128
        %v952 = vld [vmem:[%s951] sm:$0xff]
        %v953 = vld [vmem:[%s951 + $0x8] sm:$0xff]
        %v954 = vld [vmem:[%s951 + $0x10] sm:$0xff]
        %v955 = vld [vmem:[%s951 + $0x18] sm:$0xff]
        %v956 = vld [vmem:[%s951 + $0x20] sm:$0xff]
        %v957 = vld [vmem:[%s951 + $0x28] sm:$0xff]
        %v958 = vld [vmem:[%s951 + $0x30] sm:$0xff]
        %v959 = vld [vmem:[%s951 + $0x38] sm:$0xff]
        %960 = vmatprep.subr.mxu0 0.0
        %961 = vmatpush1.msra.mxu0 %v952
        %962 = vmatprep.subr.mxu0 0.0
        %963 = vmatpush1.msra.mxu0 %v953
        %964 = vmatprep.subr.mxu0 0.0
        %965 = vmatpush1.msra.mxu0 %v954
        %966 = vmatprep.subr.mxu0 0.0
        %967 = vmatpush1.msra.mxu0 %v955
        %968 = vmatprep.subr.mxu0 0.0
        %969 = vmatpush1.msra.mxu0 %v956
        %970 = vmatprep.subr.mxu0 0.0
        %971 = vmatpush1.msra.mxu0 %v957
        %972 = vmatprep.subr.mxu0 0.0
        %973 = vmatpush1.msra.mxu0 %v958
        %974 = vmatprep.subr.mxu0 0.0
        %975 = vmatpush1.msra.mxu0 %v959
        %976 = vmatprep.subr.mxu0 0.0
        %977 = vmatpush1.msra.mxu0 0.0
        %978 = vmatprep.subr.mxu0 0.0
        %979 = vmatpush1.msra.mxu0 0.0
        %980 = vmatprep.subr.mxu0 0.0
        %981 = vmatpush1.msra.mxu0 0.0
        %982 = vmatprep.subr.mxu0 0.0
        %983 = vmatpush1.msra.mxu0 0.0
        %984 = vmatprep.subr.mxu0 0.0
        %985 = vmatpush1.msra.mxu0 0.0
        %986 = vmatprep.subr.mxu0 0.0
        %987 = vmatpush1.msra.mxu0 0.0
        %988 = vmatprep.subr.mxu0 0.0
        %989 = vmatpush1.msra.mxu0 0.0
        %990 = vmatprep.subr.mxu0 0.0
        %991 = vmatpush1.msra.mxu0 0.0
        %992 = vmatprep.subr.mxu0 0.0
        %993 = vmatpush1.msra.mxu0 0.0
        %994 = vmatprep.subr.mxu0 0.0
        %995 = vmatpush1.msra.mxu0 0.0
        %996 = vmatprep.subr.mxu0 0.0
        %997 = vmatpush1.msra.mxu0 0.0
        %998 = vmatprep.subr.mxu0 0.0
        %999 = vmatpush1.msra.mxu0 0.0
        %1000 = vmatprep.subr.mxu0 0.0
        %1001 = vmatpush1.msra.mxu0 0.0
        %1002 = vmatprep.subr.mxu0 0.0
        %1003 = vmatpush1.msra.mxu0 0.0
        %1004 = vmatprep.subr.mxu0 0.0
        %1005 = vmatpush1.msra.mxu0 0.0
        %1006 = vmatprep.subr.mxu0 0.0
        %1007 = vmatpush1.msra.mxu0 0.0
        %1008 = vmatprep.subr.mxu0 0.0
        %1009 = vmatpush1.msra.mxu0 0.0
        %1010 = vmatprep.subr.mxu0 0.0
        %1011 = vmatpush1.msra.mxu0 0.0
        %1012 = vmatprep.subr.mxu0 0.0
        %1013 = vmatpush1.msra.mxu0 0.0
        %1014 = vmatprep.subr.mxu0 0.0
        %1015 = vmatpush1.msra.mxu0 0.0
        %1016 = vmatprep.subr.mxu0 0.0
        %1017 = vmatpush1.msra.mxu0 0.0
        %1018 = vmatprep.subr.mxu0 0.0
        %1019 = vmatpush1.msra.mxu0 0.0
        %1020 = vmatprep.subr.mxu0 0.0
        %1021 = vmatpush1.msra.mxu0 0.0
        %1022 = vmatprep.subr.mxu0 0.0
        %1023 = vmatpush1.msra.mxu0 0.0
        %1024 = vmatprep.mubr.f32.mxu0 0.0
        %1025 = vmatmul.mubr.f32.gmra.mrb[0].mxu0 %v691
        %v1026 = vpop.f32.mrb[0].mxu0
        %v1027 = vadd.f32 0.0, %v1026
        %v1028 = vpop.f32.mrb[0].mxu0
        %1029 = vmatprep.mubr.f32.mxu0 0.0
        %1030 = vmatmul.mubr.f32.gmra.mrb[0].mxu0 %v694
        %v1031 = vpop.f32.mrb[0].mxu0
        %v1032 = vadd.f32 0.0, %v1031
        %v1033 = vpop.f32.mrb[0].mxu0
        %1034 = vdwg.mxu0
        %v1035 = vadd.f32 %v943, %v1027
        %v1036 = vadd.f32 %v948, %v1032
        %v1037 = vld [vmem:[%s6] sm:$0x1]
        %v1039 = vlaneseq
        %v1040 = vshrl.u32 %v1039, 7
        %v1041 = vsub.s32 0, %v1040
        %v1042 = vrot.slane %v1037, %v1041
        %v1044 = vadd.f32 %v1035, %v1042
        %v1045 = vadd.f32 %v1036, %v1042
        %v1046 = vrot.slane %v782, 7
        %v1047 = vrot.slane %v783, 7
        %v1048 = vsel %vm489, %v1046, %v1047
        %v1049 = vsel %vm489, %v1047, %v1046
        %v1050 = vsel %vm483, 0.0, %v1049
        %v1051 = vsel %vm484, 0.0, %v1048
        %v1052 = vrot.slane %v782, 1
        %v1053 = vrot.slane %v783, 1
        %v1054 = vsel %vm496, %v1052, %v1053
        %v1055 = vsel %vm496, %v1053, %v1052
        %v1056 = vsel %vm485, 0.0, %v1054
        %v1057 = vsel %vm486, 0.0, %v1055
        %v1058 = vld [vmem:[#allocation7] sm:$0xff]
        %v1059 = vld [vmem:[#allocation7 + $0x8] sm:$0xff]
        %v1060 = vld [vmem:[#allocation7 + $0x10] sm:$0xff]
        %v1061 = vld [vmem:[#allocation7 + $0x18] sm:$0xff]
        %v1062 = vld [vmem:[#allocation7 + $0x20] sm:$0xff]
        %v1063 = vld [vmem:[#allocation7 + $0x28] sm:$0xff]
        %v1064 = vld [vmem:[#allocation7 + $0x30] sm:$0xff]
        %v1065 = vld [vmem:[#allocation7 + $0x38] sm:$0xff]
        %v1066 = vld [vmem:[#allocation7 + $0x40] sm:$0xff]
        %v1067 = vld [vmem:[#allocation7 + $0x48] sm:$0xff]
        %v1068 = vld [vmem:[#allocation7 + $0x50] sm:$0xff]
        %v1069 = vld [vmem:[#allocation7 + $0x58] sm:$0xff]
        %v1070 = vld [vmem:[#allocation7 + $0x60] sm:$0xff]
        %v1071 = vld [vmem:[#allocation7 + $0x68] sm:$0xff]
        %v1072 = vld [vmem:[#allocation7 + $0x70] sm:$0xff]
        %v1073 = vld [vmem:[#allocation7 + $0x78] sm:$0xff]
        %s1074 = scalar_lea.vmem [#allocation7], 128
        %v1075 = vld [vmem:[%s1074] sm:$0xff]
        %v1076 = vld [vmem:[%s1074 + $0x8] sm:$0xff]
        %v1077 = vld [vmem:[%s1074 + $0x10] sm:$0xff]
        %v1078 = vld [vmem:[%s1074 + $0x18] sm:$0xff]
        %v1079 = vld [vmem:[%s1074 + $0x20] sm:$0xff]
        %v1080 = vld [vmem:[%s1074 + $0x28] sm:$0xff]
        %v1081 = vld [vmem:[%s1074 + $0x30] sm:$0xff]
        %v1082 = vld [vmem:[%s1074 + $0x38] sm:$0xff]
        %v1083 = vld [vmem:[%s1074 + $0x40] sm:$0xff]
        %v1084 = vld [vmem:[%s1074 + $0x48] sm:$0xff]
        %v1085 = vld [vmem:[%s1074 + $0x50] sm:$0xff]
        %v1086 = vld [vmem:[%s1074 + $0x58] sm:$0xff]
        %v1087 = vld [vmem:[%s1074 + $0x60] sm:$0xff]
        %v1088 = vld [vmem:[%s1074 + $0x68] sm:$0xff]
        %v1089 = vld [vmem:[%s1074 + $0x70] sm:$0xff]
        %v1090 = vld [vmem:[%s1074 + $0x78] sm:$0xff]
        %1091 = vmatprep.subr.mxu0 0.0
        %1092 = vmatpush1.msra.mxu0 %v1075
        %1093 = vmatprep.subr.mxu0 0.0
        %1094 = vmatpush1.msra.mxu0 %v1076
        %1095 = vmatprep.subr.mxu0 0.0
        %1096 = vmatpush1.msra.mxu0 %v1077
        %1097 = vmatprep.subr.mxu0 0.0
        %1098 = vmatpush1.msra.mxu0 %v1078
        %1099 = vmatprep.subr.mxu0 0.0
        %1100 = vmatpush1.msra.mxu0 %v1079
        %1101 = vmatprep.subr.mxu0 0.0
        %1102 = vmatpush1.msra.mxu0 %v1080
        %1103 = vmatprep.subr.mxu0 0.0
        %1104 = vmatpush1.msra.mxu0 %v1081
        %1105 = vmatprep.subr.mxu0 0.0
        %1106 = vmatpush1.msra.mxu0 %v1082
        %1107 = vmatprep.subr.mxu0 0.0
        %1108 = vmatpush1.msra.mxu0 %v1083
        %1109 = vmatprep.subr.mxu0 0.0
        %1110 = vmatpush1.msra.mxu0 %v1084
        %1111 = vmatprep.subr.mxu0 0.0
        %1112 = vmatpush1.msra.mxu0 %v1085
        %1113 = vmatprep.subr.mxu0 0.0
        %1114 = vmatpush1.msra.mxu0 %v1086
        %1115 = vmatprep.subr.mxu0 0.0
        %1116 = vmatpush1.msra.mxu0 %v1087
        %1117 = vmatprep.subr.mxu0 0.0
        %1118 = vmatpush1.msra.mxu0 %v1088
        %1119 = vmatprep.subr.mxu0 0.0
        %1120 = vmatpush1.msra.mxu0 %v1089
        %1121 = vmatprep.subr.mxu0 0.0
        %1122 = vmatpush1.msra.mxu0 %v1090
        %1123 = vmatprep.subr.mxu0 0.0
        %1124 = vmatpush1.msra.mxu0 0.0
        %1125 = vmatprep.subr.mxu0 0.0
        %1126 = vmatpush1.msra.mxu0 0.0
        %1127 = vmatprep.subr.mxu0 0.0
        %1128 = vmatpush1.msra.mxu0 0.0
        %1129 = vmatprep.subr.mxu0 0.0
        %1130 = vmatpush1.msra.mxu0 0.0
        %1131 = vmatprep.subr.mxu0 0.0
        %1132 = vmatpush1.msra.mxu0 0.0
        %1133 = vmatprep.subr.mxu0 0.0
        %1134 = vmatpush1.msra.mxu0 0.0
        %1135 = vmatprep.subr.mxu0 0.0
        %1136 = vmatpush1.msra.mxu0 0.0
        %1137 = vmatprep.subr.mxu0 0.0
        %1138 = vmatpush1.msra.mxu0 0.0
        %1139 = vmatprep.subr.mxu0 0.0
        %1140 = vmatpush1.msra.mxu0 0.0
        %1141 = vmatprep.subr.mxu0 0.0
        %1142 = vmatpush1.msra.mxu0 0.0
        %1143 = vmatprep.subr.mxu0 0.0
        %1144 = vmatpush1.msra.mxu0 0.0
        %1145 = vmatprep.subr.mxu0 0.0
        %1146 = vmatpush1.msra.mxu0 0.0
        %1147 = vmatprep.subr.mxu0 0.0
        %1148 = vmatpush1.msra.mxu0 0.0
        %1149 = vmatprep.subr.mxu0 0.0
        %1150 = vmatpush1.msra.mxu0 0.0
        %1151 = vmatprep.subr.mxu0 0.0
        %1152 = vmatpush1.msra.mxu0 0.0
        %1153 = vmatprep.subr.mxu0 0.0
        %1154 = vmatpush1.msra.mxu0 0.0
        %1155 = vmatprep.mubr.f32.mxu0 0.0
        %1156 = vmatmul.mubr.f32.gmra.mrb[0].mxu0 %v782
        %v1157 = vpop.f32.mrb[0].mxu0
        %v1158 = vadd.f32 0.0, %v1157
        %v1159 = vpop.f32.mrb[0].mxu0
        %1160 = vmatprep.mubr.f32.mxu0 0.0
        %1161 = vmatmul.mubr.f32.gmra.mrb[0].mxu0 %v783
        %v1162 = vpop.f32.mrb[0].mxu0
        %v1163 = vadd.f32 0.0, %v1162
        %v1164 = vpop.f32.mrb[0].mxu0
        %1165 = vdwg.mxu0
        %1166 = vmatprep.subr.mxu0 0.0
        %1167 = vmatpush1.msra.mxu0 %v1058
        %1168 = vmatprep.subr.mxu0 0.0
        %1169 = vmatpush1.msra.mxu0 %v1059
        %1170 = vmatprep.subr.mxu0 0.0
        %1171 = vmatpush1.msra.mxu0 %v1060
        %1172 = vmatprep.subr.mxu0 0.0
        %1173 = vmatpush1.msra.mxu0 %v1061
        %1174 = vmatprep.subr.mxu0 0.0
        %1175 = vmatpush1.msra.mxu0 %v1062
        %1176 = vmatprep.subr.mxu0 0.0
        %1177 = vmatpush1.msra.mxu0 %v1063
        %1178 = vmatprep.subr.mxu0 0.0
        %1179 = vmatpush1.msra.mxu0 %v1064
        %1180 = vmatprep.subr.mxu0 0.0
        %1181 = vmatpush1.msra.mxu0 %v1065
        %1182 = vmatprep.subr.mxu0 0.0
        %1183 = vmatpush1.msra.mxu0 %v1066
        %1184 = vmatprep.subr.mxu0 0.0
        %1185 = vmatpush1.msra.mxu0 %v1067
        %1186 = vmatprep.subr.mxu0 0.0
        %1187 = vmatpush1.msra.mxu0 %v1068
        %1188 = vmatprep.subr.mxu0 0.0
        %1189 = vmatpush1.msra.mxu0 %v1069
        %1190 = vmatprep.subr.mxu0 0.0
        %1191 = vmatpush1.msra.mxu0 %v1070
        %1192 = vmatprep.subr.mxu0 0.0
        %1193 = vmatpush1.msra.mxu0 %v1071
        %1194 = vmatprep.subr.mxu0 0.0
        %1195 = vmatpush1.msra.mxu0 %v1072
        %1196 = vmatprep.subr.mxu0 0.0
        %1197 = vmatpush1.msra.mxu0 %v1073
        %1198 = vmatprep.subr.mxu0 0.0
        %1199 = vmatpush1.msra.mxu0 0.0
        %1200 = vmatprep.subr.mxu0 0.0
        %1201 = vmatpush1.msra.mxu0 0.0
        %1202 = vmatprep.subr.mxu0 0.0
        %1203 = vmatpush1.msra.mxu0 0.0
        %1204 = vmatprep.subr.mxu0 0.0
        %1205 = vmatpush1.msra.mxu0 0.0
        %1206 = vmatprep.subr.mxu0 0.0
        %1207 = vmatpush1.msra.mxu0 0.0
        %1208 = vmatprep.subr.mxu0 0.0
        %1209 = vmatpush1.msra.mxu0 0.0
        %1210 = vmatprep.subr.mxu0 0.0
        %1211 = vmatpush1.msra.mxu0 0.0
        %1212 = vmatprep.subr.mxu0 0.0
        %1213 = vmatpush1.msra.mxu0 0.0
        %1214 = vmatprep.subr.mxu0 0.0
        %1215 = vmatpush1.msra.mxu0 0.0
        %1216 = vmatprep.subr.mxu0 0.0
        %1217 = vmatpush1.msra.mxu0 0.0
        %1218 = vmatprep.subr.mxu0 0.0
        %1219 = vmatpush1.msra.mxu0 0.0
        %1220 = vmatprep.subr.mxu0 0.0
        %1221 = vmatpush1.msra.mxu0 0.0
        %1222 = vmatprep.subr.mxu0 0.0
        %1223 = vmatpush1.msra.mxu0 0.0
        %1224 = vmatprep.subr.mxu0 0.0
        %1225 = vmatpush1.msra.mxu0 0.0
        %1226 = vmatprep.subr.mxu0 0.0
        %1227 = vmatpush1.msra.mxu0 0.0
        %1228 = vmatprep.subr.mxu0 0.0
        %1229 = vmatpush1.msra.mxu0 0.0
        %1230 = vmatprep.mubr.f32.mxu0 0.0
        %1231 = vmatmul.mubr.f32.gmra.mrb[0].mxu0 %v1050
        %v1232 = vpop.f32.mrb[0].mxu0
        %v1233 = vadd.f32 %v1158, %v1232
        %v1234 = vpop.f32.mrb[0].mxu0
        %1235 = vmatprep.mubr.f32.mxu0 0.0
        %1236 = vmatmul.mubr.f32.gmra.mrb[0].mxu0 %v1051
        %v1237 = vpop.f32.mrb[0].mxu0
        %v1238 = vadd.f32 %v1163, %v1237
        %v1239 = vpop.f32.mrb[0].mxu0
        %1240 = vdwg.mxu0
        %s1241 = scalar_lea.vmem [#allocation7], 256
        %v1242 = vld [vmem:[%s1241] sm:$0xff]
        %v1243 = vld [vmem:[%s1241 + $0x8] sm:$0xff]
        %v1244 = vld [vmem:[%s1241 + $0x10] sm:$0xff]
        %v1245 = vld [vmem:[%s1241 + $0x18] sm:$0xff]
        %v1246 = vld [vmem:[%s1241 + $0x20] sm:$0xff]
        %v1247 = vld [vmem:[%s1241 + $0x28] sm:$0xff]
        %v1248 = vld [vmem:[%s1241 + $0x30] sm:$0xff]
        %v1249 = vld [vmem:[%s1241 + $0x38] sm:$0xff]
        %v1250 = vld [vmem:[%s1241 + $0x40] sm:$0xff]
        %v1251 = vld [vmem:[%s1241 + $0x48] sm:$0xff]
        %v1252 = vld [vmem:[%s1241 + $0x50] sm:$0xff]
        %v1253 = vld [vmem:[%s1241 + $0x58] sm:$0xff]
        %v1254 = vld [vmem:[%s1241 + $0x60] sm:$0xff]
        %v1255 = vld [vmem:[%s1241 + $0x68] sm:$0xff]
        %v1256 = vld [vmem:[%s1241 + $0x70] sm:$0xff]
        %v1257 = vld [vmem:[%s1241 + $0x78] sm:$0xff]
        %1258 = vmatprep.subr.mxu0 0.0
        %1259 = vmatpush1.msra.mxu0 %v1242
        %1260 = vmatprep.subr.mxu0 0.0
        %1261 = vmatpush1.msra.mxu0 %v1243
        %1262 = vmatprep.subr.mxu0 0.0
        %1263 = vmatpush1.msra.mxu0 %v1244
        %1264 = vmatprep.subr.mxu0 0.0
        %1265 = vmatpush1.msra.mxu0 %v1245
        %1266 = vmatprep.subr.mxu0 0.0
        %1267 = vmatpush1.msra.mxu0 %v1246
        %1268 = vmatprep.subr.mxu0 0.0
        %1269 = vmatpush1.msra.mxu0 %v1247
        %1270 = vmatprep.subr.mxu0 0.0
        %1271 = vmatpush1.msra.mxu0 %v1248
        %1272 = vmatprep.subr.mxu0 0.0
        %1273 = vmatpush1.msra.mxu0 %v1249
        %1274 = vmatprep.subr.mxu0 0.0
        %1275 = vmatpush1.msra.mxu0 %v1250
        %1276 = vmatprep.subr.mxu0 0.0
        %1277 = vmatpush1.msra.mxu0 %v1251
        %1278 = vmatprep.subr.mxu0 0.0
        %1279 = vmatpush1.msra.mxu0 %v1252
        %1280 = vmatprep.subr.mxu0 0.0
        %1281 = vmatpush1.msra.mxu0 %v1253
        %1282 = vmatprep.subr.mxu0 0.0
        %1283 = vmatpush1.msra.mxu0 %v1254
        %1284 = vmatprep.subr.mxu0 0.0
        %1285 = vmatpush1.msra.mxu0 %v1255
        %1286 = vmatprep.subr.mxu0 0.0
        %1287 = vmatpush1.msra.mxu0 %v1256
        %1288 = vmatprep.subr.mxu0 0.0
        %1289 = vmatpush1.msra.mxu0 %v1257
        %1290 = vmatprep.subr.mxu0 0.0
        %1291 = vmatpush1.msra.mxu0 0.0
        %1292 = vmatprep.subr.mxu0 0.0
        %1293 = vmatpush1.msra.mxu0 0.0
        %1294 = vmatprep.subr.mxu0 0.0
        %1295 = vmatpush1.msra.mxu0 0.0
        %1296 = vmatprep.subr.mxu0 0.0
        %1297 = vmatpush1.msra.mxu0 0.0
        %1298 = vmatprep.subr.mxu0 0.0
        %1299 = vmatpush1.msra.mxu0 0.0
        %1300 = vmatprep.subr.mxu0 0.0
        %1301 = vmatpush1.msra.mxu0 0.0
        %1302 = vmatprep.subr.mxu0 0.0
        %1303 = vmatpush1.msra.mxu0 0.0
        %1304 = vmatprep.subr.mxu0 0.0
        %1305 = vmatpush1.msra.mxu0 0.0
        %1306 = vmatprep.subr.mxu0 0.0
        %1307 = vmatpush1.msra.mxu0 0.0
        %1308 = vmatprep.subr.mxu0 0.0
        %1309 = vmatpush1.msra.mxu0 0.0
        %1310 = vmatprep.subr.mxu0 0.0
        %1311 = vmatpush1.msra.mxu0 0.0
        %1312 = vmatprep.subr.mxu0 0.0
        %1313 = vmatpush1.msra.mxu0 0.0
        %1314 = vmatprep.subr.mxu0 0.0
        %1315 = vmatpush1.msra.mxu0 0.0
        %1316 = vmatprep.subr.mxu0 0.0
        %1317 = vmatpush1.msra.mxu0 0.0
        %1318 = vmatprep.subr.mxu0 0.0
        %1319 = vmatpush1.msra.mxu0 0.0
        %1320 = vmatprep.subr.mxu0 0.0
        %1321 = vmatpush1.msra.mxu0 0.0
        %1322 = vmatprep.mubr.f32.mxu0 0.0
        %1323 = vmatmul.mubr.f32.gmra.mrb[0].mxu0 %v1056
        %v1324 = vpop.f32.mrb[0].mxu0
        %v1325 = vadd.f32 0.0, %v1324
        %v1326 = vpop.f32.mrb[0].mxu0
        %1327 = vmatprep.mubr.f32.mxu0 0.0
        %1328 = vmatmul.mubr.f32.gmra.mrb[0].mxu0 %v1057
        %v1329 = vpop.f32.mrb[0].mxu0
        %v1330 = vadd.f32 0.0, %v1329
        %v1331 = vpop.f32.mrb[0].mxu0
        %1332 = vdwg.mxu0
        %v1333 = vadd.f32 %v1233, %v1325
        %v1334 = vadd.f32 %v1238, %v1330
        %v1335 = vld [vmem:[%s4] sm:$0x1]
        %v1337 = vlaneseq
        %v1338 = vshrl.u32 %v1337, 7
        %v1339 = vsub.s32 0, %v1338
        %v1340 = vrot.slane %v1335, %v1339
        %v1342 = vadd.f32 %v1333, %v1340
        %v1343 = vadd.f32 %v1334, %v1340
        %v1344 = vadd.f32 %v1342, %v1044
        %v1345 = vadd.f32 %v1343, %v1045
        %v1346 = vmax.f32 %v1344, 0.0
        %v1347 = vmax.f32 %v1345, 0.0
        %v1348 = vrot.slane %v1346, 7
        %v1349 = vrot.slane %v1347, 7
        %v1350 = vsel %vm489, %v1348, %v1349
        %v1351 = vsel %vm489, %v1349, %v1348
        %v1352 = vsel %vm483, 0.0, %v1351
        %v1353 = vsel %vm484, 0.0, %v1350
        %v1354 = vrot.slane %v1346, 1
        %v1355 = vrot.slane %v1347, 1
        %v1356 = vsel %vm496, %v1354, %v1355
        %v1357 = vsel %vm496, %v1355, %v1354
        %v1358 = vsel %vm485, 0.0, %v1356
        %v1359 = vsel %vm486, 0.0, %v1357
        %v1360 = vld [vmem:[#allocation10] sm:$0xff]
        %v1361 = vld [vmem:[#allocation10 + $0x8] sm:$0xff]
        %v1362 = vld [vmem:[#allocation10 + $0x10] sm:$0xff]
        %v1363 = vld [vmem:[#allocation10 + $0x18] sm:$0xff]
        %v1364 = vld [vmem:[#allocation10 + $0x20] sm:$0xff]
        %v1365 = vld [vmem:[#allocation10 + $0x28] sm:$0xff]
        %v1366 = vld [vmem:[#allocation10 + $0x30] sm:$0xff]
        %v1367 = vld [vmem:[#allocation10 + $0x38] sm:$0xff]
        %v1368 = vld [vmem:[#allocation10 + $0x40] sm:$0xff]
        %v1369 = vld [vmem:[#allocation10 + $0x48] sm:$0xff]
        %v1370 = vld [vmem:[#allocation10 + $0x50] sm:$0xff]
        %v1371 = vld [vmem:[#allocation10 + $0x58] sm:$0xff]
        %v1372 = vld [vmem:[#allocation10 + $0x60] sm:$0xff]
        %v1373 = vld [vmem:[#allocation10 + $0x68] sm:$0xff]
        %v1374 = vld [vmem:[#allocation10 + $0x70] sm:$0xff]
        %v1375 = vld [vmem:[#allocation10 + $0x78] sm:$0xff]
        %s1376 = scalar_lea.vmem [#allocation10], 128
        %v1377 = vld [vmem:[%s1376] sm:$0xff]
        %v1378 = vld [vmem:[%s1376 + $0x8] sm:$0xff]
        %v1379 = vld [vmem:[%s1376 + $0x10] sm:$0xff]
        %v1380 = vld [vmem:[%s1376 + $0x18] sm:$0xff]
        %v1381 = vld [vmem:[%s1376 + $0x20] sm:$0xff]
        %v1382 = vld [vmem:[%s1376 + $0x28] sm:$0xff]
        %v1383 = vld [vmem:[%s1376 + $0x30] sm:$0xff]
        %v1384 = vld [vmem:[%s1376 + $0x38] sm:$0xff]
        %v1385 = vld [vmem:[%s1376 + $0x40] sm:$0xff]
        %v1386 = vld [vmem:[%s1376 + $0x48] sm:$0xff]
        %v1387 = vld [vmem:[%s1376 + $0x50] sm:$0xff]
        %v1388 = vld [vmem:[%s1376 + $0x58] sm:$0xff]
        %v1389 = vld [vmem:[%s1376 + $0x60] sm:$0xff]
        %v1390 = vld [vmem:[%s1376 + $0x68] sm:$0xff]
        %v1391 = vld [vmem:[%s1376 + $0x70] sm:$0xff]
        %v1392 = vld [vmem:[%s1376 + $0x78] sm:$0xff]
        %1393 = vmatprep.subr.mxu0 0.0
        %1394 = vmatpush1.msra.mxu0 %v1377
        %1395 = vmatprep.subr.mxu0 0.0
        %1396 = vmatpush1.msra.mxu0 %v1378
        %1397 = vmatprep.subr.mxu0 0.0
        %1398 = vmatpush1.msra.mxu0 %v1379
        %1399 = vmatprep.subr.mxu0 0.0
        %1400 = vmatpush1.msra.mxu0 %v1380
        %1401 = vmatprep.subr.mxu0 0.0
        %1402 = vmatpush1.msra.mxu0 %v1381
        %1403 = vmatprep.subr.mxu0 0.0
        %1404 = vmatpush1.msra.mxu0 %v1382
        %1405 = vmatprep.subr.mxu0 0.0
        %1406 = vmatpush1.msra.mxu0 %v1383
        %1407 = vmatprep.subr.mxu0 0.0
        %1408 = vmatpush1.msra.mxu0 %v1384
        %1409 = vmatprep.subr.mxu0 0.0
        %1410 = vmatpush1.msra.mxu0 %v1385
        %1411 = vmatprep.subr.mxu0 0.0
        %1412 = vmatpush1.msra.mxu0 %v1386
        %1413 = vmatprep.subr.mxu0 0.0
        %1414 = vmatpush1.msra.mxu0 %v1387
        %1415 = vmatprep.subr.mxu0 0.0
        %1416 = vmatpush1.msra.mxu0 %v1388
        %1417 = vmatprep.subr.mxu0 0.0
        %1418 = vmatpush1.msra.mxu0 %v1389
        %1419 = vmatprep.subr.mxu0 0.0
        %1420 = vmatpush1.msra.mxu0 %v1390
        %1421 = vmatprep.subr.mxu0 0.0
        %1422 = vmatpush1.msra.mxu0 %v1391
        %1423 = vmatprep.subr.mxu0 0.0
        %1424 = vmatpush1.msra.mxu0 %v1392
        %1425 = vmatprep.subr.mxu0 0.0
        %1426 = vmatpush1.msra.mxu0 0.0
        %1427 = vmatprep.subr.mxu0 0.0
        %1428 = vmatpush1.msra.mxu0 0.0
        %1429 = vmatprep.subr.mxu0 0.0
        %1430 = vmatpush1.msra.mxu0 0.0
        %1431 = vmatprep.subr.mxu0 0.0
        %1432 = vmatpush1.msra.mxu0 0.0
        %1433 = vmatprep.subr.mxu0 0.0
        %1434 = vmatpush1.msra.mxu0 0.0
        %1435 = vmatprep.subr.mxu0 0.0
        %1436 = vmatpush1.msra.mxu0 0.0
        %1437 = vmatprep.subr.mxu0 0.0
        %1438 = vmatpush1.msra.mxu0 0.0
        %1439 = vmatprep.subr.mxu0 0.0
        %1440 = vmatpush1.msra.mxu0 0.0
        %1441 = vmatprep.subr.mxu0 0.0
        %1442 = vmatpush1.msra.mxu0 0.0
        %1443 = vmatprep.subr.mxu0 0.0
        %1444 = vmatpush1.msra.mxu0 0.0
        %1445 = vmatprep.subr.mxu0 0.0
        %1446 = vmatpush1.msra.mxu0 0.0
        %1447 = vmatprep.subr.mxu0 0.0
        %1448 = vmatpush1.msra.mxu0 0.0
        %1449 = vmatprep.subr.mxu0 0.0
        %1450 = vmatpush1.msra.mxu0 0.0
        %1451 = vmatprep.subr.mxu0 0.0
        %1452 = vmatpush1.msra.mxu0 0.0
        %1453 = vmatprep.subr.mxu0 0.0
        %1454 = vmatpush1.msra.mxu0 0.0
        %1455 = vmatprep.subr.mxu0 0.0
        %1456 = vmatpush1.msra.mxu0 0.0
        %1457 = vmatprep.mubr.f32.mxu0 0.0
        %1458 = vmatmul.mubr.f32.gmra.mrb[0].mxu0 %v1346
        %v1459 = vpop.f32.mrb[0].mxu0
        %v1460 = vadd.f32 0.0, %v1459
        %v1461 = vpop.f32.mrb[0].mxu0
        %1462 = vmatprep.mubr.f32.mxu0 0.0
        %1463 = vmatmul.mubr.f32.gmra.mrb[0].mxu0 %v1347
        %v1464 = vpop.f32.mrb[0].mxu0
        %v1465 = vadd.f32 0.0, %v1464
        %v1466 = vpop.f32.mrb[0].mxu0
        %1467 = vdwg.mxu0
        %1468 = vmatprep.subr.mxu0 0.0
        %1469 = vmatpush1.msra.mxu0 %v1360
        %1470 = vmatprep.subr.mxu0 0.0
        %1471 = vmatpush1.msra.mxu0 %v1361
        %1472 = vmatprep.subr.mxu0 0.0
        %1473 = vmatpush1.msra.mxu0 %v1362
        %1474 = vmatprep.subr.mxu0 0.0
        %1475 = vmatpush1.msra.mxu0 %v1363
        %1476 = vmatprep.subr.mxu0 0.0
        %1477 = vmatpush1.msra.mxu0 %v1364
        %1478 = vmatprep.subr.mxu0 0.0
        %1479 = vmatpush1.msra.mxu0 %v1365
        %1480 = vmatprep.subr.mxu0 0.0
        %1481 = vmatpush1.msra.mxu0 %v1366
        %1482 = vmatprep.subr.mxu0 0.0
        %1483 = vmatpush1.msra.mxu0 %v1367
        %1484 = vmatprep.subr.mxu0 0.0
        %1485 = vmatpush1.msra.mxu0 %v1368
        %1486 = vmatprep.subr.mxu0 0.0
        %1487 = vmatpush1.msra.mxu0 %v1369
        %1488 = vmatprep.subr.mxu0 0.0
        %1489 = vmatpush1.msra.mxu0 %v1370
        %1490 = vmatprep.subr.mxu0 0.0
        %1491 = vmatpush1.msra.mxu0 %v1371
        %1492 = vmatprep.subr.mxu0 0.0
        %1493 = vmatpush1.msra.mxu0 %v1372
        %1494 = vmatprep.subr.mxu0 0.0
        %1495 = vmatpush1.msra.mxu0 %v1373
        %1496 = vmatprep.subr.mxu0 0.0
        %1497 = vmatpush1.msra.mxu0 %v1374
        %1498 = vmatprep.subr.mxu0 0.0
        %1499 = vmatpush1.msra.mxu0 %v1375
        %1500 = vmatprep.subr.mxu0 0.0
        %1501 = vmatpush1.msra.mxu0 0.0
        %1502 = vmatprep.subr.mxu0 0.0
        %1503 = vmatpush1.msra.mxu0 0.0
        %1504 = vmatprep.subr.mxu0 0.0
        %1505 = vmatpush1.msra.mxu0 0.0
        %1506 = vmatprep.subr.mxu0 0.0
        %1507 = vmatpush1.msra.mxu0 0.0
        %1508 = vmatprep.subr.mxu0 0.0
        %1509 = vmatpush1.msra.mxu0 0.0
        %1510 = vmatprep.subr.mxu0 0.0
        %1511 = vmatpush1.msra.mxu0 0.0
        %1512 = vmatprep.subr.mxu0 0.0
        %1513 = vmatpush1.msra.mxu0 0.0
        %1514 = vmatprep.subr.mxu0 0.0
        %1515 = vmatpush1.msra.mxu0 0.0
        %1516 = vmatprep.subr.mxu0 0.0
        %1517 = vmatpush1.msra.mxu0 0.0
        %1518 = vmatprep.subr.mxu0 0.0
        %1519 = vmatpush1.msra.mxu0 0.0
        %1520 = vmatprep.subr.mxu0 0.0
        %1521 = vmatpush1.msra.mxu0 0.0
        %1522 = vmatprep.subr.mxu0 0.0
        %1523 = vmatpush1.msra.mxu0 0.0
        %1524 = vmatprep.subr.mxu0 0.0
        %1525 = vmatpush1.msra.mxu0 0.0
        %1526 = vmatprep.subr.mxu0 0.0
        %1527 = vmatpush1.msra.mxu0 0.0
        %1528 = vmatprep.subr.mxu0 0.0
        %1529 = vmatpush1.msra.mxu0 0.0
        %1530 = vmatprep.subr.mxu0 0.0
        %1531 = vmatpush1.msra.mxu0 0.0
        %1532 = vmatprep.mubr.f32.mxu0 0.0
        %1533 = vmatmul.mubr.f32.gmra.mrb[0].mxu0 %v1352
        %v1534 = vpop.f32.mrb[0].mxu0
        %v1535 = vadd.f32 %v1460, %v1534
        %v1536 = vpop.f32.mrb[0].mxu0
        %1537 = vmatprep.mubr.f32.mxu0 0.0
        %1538 = vmatmul.mubr.f32.gmra.mrb[0].mxu0 %v1353
        %v1539 = vpop.f32.mrb[0].mxu0
        %v1540 = vadd.f32 %v1465, %v1539
        %v1541 = vpop.f32.mrb[0].mxu0
        %1542 = vdwg.mxu0
        %s1543 = scalar_lea.vmem [#allocation10], 256
        %v1544 = vld [vmem:[%s1543] sm:$0xff]
        %v1545 = vld [vmem:[%s1543 + $0x8] sm:$0xff]
        %v1546 = vld [vmem:[%s1543 + $0x10] sm:$0xff]
        %v1547 = vld [vmem:[%s1543 + $0x18] sm:$0xff]
        %v1548 = vld [vmem:[%s1543 + $0x20] sm:$0xff]
        %v1549 = vld [vmem:[%s1543 + $0x28] sm:$0xff]
        %v1550 = vld [vmem:[%s1543 + $0x30] sm:$0xff]
        %v1551 = vld [vmem:[%s1543 + $0x38] sm:$0xff]
        %v1552 = vld [vmem:[%s1543 + $0x40] sm:$0xff]
        %v1553 = vld [vmem:[%s1543 + $0x48] sm:$0xff]
        %v1554 = vld [vmem:[%s1543 + $0x50] sm:$0xff]
        %v1555 = vld [vmem:[%s1543 + $0x58] sm:$0xff]
        %v1556 = vld [vmem:[%s1543 + $0x60] sm:$0xff]
        %v1557 = vld [vmem:[%s1543 + $0x68] sm:$0xff]
        %v1558 = vld [vmem:[%s1543 + $0x70] sm:$0xff]
        %v1559 = vld [vmem:[%s1543 + $0x78] sm:$0xff]
        %1560 = vmatprep.subr.mxu0 0.0
        %1561 = vmatpush1.msra.mxu0 %v1544
        %1562 = vmatprep.subr.mxu0 0.0
        %1563 = vmatpush1.msra.mxu0 %v1545
        %1564 = vmatprep.subr.mxu0 0.0
        %1565 = vmatpush1.msra.mxu0 %v1546
        %1566 = vmatprep.subr.mxu0 0.0
        %1567 = vmatpush1.msra.mxu0 %v1547
        %1568 = vmatprep.subr.mxu0 0.0
        %1569 = vmatpush1.msra.mxu0 %v1548
        %1570 = vmatprep.subr.mxu0 0.0
        %1571 = vmatpush1.msra.mxu0 %v1549
        %1572 = vmatprep.subr.mxu0 0.0
        %1573 = vmatpush1.msra.mxu0 %v1550
        %1574 = vmatprep.subr.mxu0 0.0
        %1575 = vmatpush1.msra.mxu0 %v1551
        %1576 = vmatprep.subr.mxu0 0.0
        %1577 = vmatpush1.msra.mxu0 %v1552
        %1578 = vmatprep.subr.mxu0 0.0
        %1579 = vmatpush1.msra.mxu0 %v1553
        %1580 = vmatprep.subr.mxu0 0.0
        %1581 = vmatpush1.msra.mxu0 %v1554
        %1582 = vmatprep.subr.mxu0 0.0
        %1583 = vmatpush1.msra.mxu0 %v1555
        %1584 = vmatprep.subr.mxu0 0.0
        %1585 = vmatpush1.msra.mxu0 %v1556
        %1586 = vmatprep.subr.mxu0 0.0
        %1587 = vmatpush1.msra.mxu0 %v1557
        %1588 = vmatprep.subr.mxu0 0.0
        %1589 = vmatpush1.msra.mxu0 %v1558
        %1590 = vmatprep.subr.mxu0 0.0
        %1591 = vmatpush1.msra.mxu0 %v1559
        %1592 = vmatprep.subr.mxu0 0.0
        %1593 = vmatpush1.msra.mxu0 0.0
        %1594 = vmatprep.subr.mxu0 0.0
        %1595 = vmatpush1.msra.mxu0 0.0
        %1596 = vmatprep.subr.mxu0 0.0
        %1597 = vmatpush1.msra.mxu0 0.0
        %1598 = vmatprep.subr.mxu0 0.0
        %1599 = vmatpush1.msra.mxu0 0.0
        %1600 = vmatprep.subr.mxu0 0.0
        %1601 = vmatpush1.msra.mxu0 0.0
        %1602 = vmatprep.subr.mxu0 0.0
        %1603 = vmatpush1.msra.mxu0 0.0
        %1604 = vmatprep.subr.mxu0 0.0
        %1605 = vmatpush1.msra.mxu0 0.0
        %1606 = vmatprep.subr.mxu0 0.0
        %1607 = vmatpush1.msra.mxu0 0.0
        %1608 = vmatprep.subr.mxu0 0.0
        %1609 = vmatpush1.msra.mxu0 0.0
        %1610 = vmatprep.subr.mxu0 0.0
        %1611 = vmatpush1.msra.mxu0 0.0
        %1612 = vmatprep.subr.mxu0 0.0
        %1613 = vmatpush1.msra.mxu0 0.0
        %1614 = vmatprep.subr.mxu0 0.0
        %1615 = vmatpush1.msra.mxu0 0.0
        %1616 = vmatprep.subr.mxu0 0.0
        %1617 = vmatpush1.msra.mxu0 0.0
        %1618 = vmatprep.subr.mxu0 0.0
        %1619 = vmatpush1.msra.mxu0 0.0
        %1620 = vmatprep.subr.mxu0 0.0
        %1621 = vmatpush1.msra.mxu0 0.0
        %1622 = vmatprep.subr.mxu0 0.0
        %1623 = vmatpush1.msra.mxu0 0.0
        %1624 = vmatprep.mubr.f32.mxu0 0.0
        %1625 = vmatmul.mubr.f32.gmra.mrb[0].mxu0 %v1358
        %v1626 = vpop.f32.mrb[0].mxu0
        %v1627 = vadd.f32 0.0, %v1626
        %v1628 = vpop.f32.mrb[0].mxu0
        %1629 = vmatprep.mubr.f32.mxu0 0.0
        %1630 = vmatmul.mubr.f32.gmra.mrb[0].mxu0 %v1359
        %v1631 = vpop.f32.mrb[0].mxu0
        %v1632 = vadd.f32 0.0, %v1631
        %v1633 = vpop.f32.mrb[0].mxu0
        %1634 = vdwg.mxu0
        %v1635 = vadd.f32 %v1535, %v1627
        %v1636 = vadd.f32 %v1540, %v1632
        %v1637 = vld [vmem:[%s8] sm:$0x1]
        %v1639 = vlaneseq
        %v1640 = vshrl.u32 %v1639, 7
        %v1641 = vsub.s32 0, %v1640
        %v1642 = vrot.slane %v1637, %v1641
        %v1644 = vadd.f32 %v1635, %v1642
        %v1645 = vadd.f32 %v1636, %v1642
        %v1646 = vmax.f32 %v1644, 0.0
        %v1647 = vmax.f32 %v1645, 0.0
        %v1648 = vrot.slane %v1646, 7
        %v1649 = vrot.slane %v1647, 7
        %v1650 = vsel %vm489, %v1648, %v1649
        %v1651 = vsel %vm489, %v1649, %v1648
        %v1652 = vsel %vm483, 0.0, %v1651
        %v1653 = vsel %vm484, 0.0, %v1650
        %v1654 = vrot.slane %v1646, 1
        %v1655 = vrot.slane %v1647, 1
        %v1656 = vsel %vm496, %v1654, %v1655
        %v1657 = vsel %vm496, %v1655, %v1654
        %v1658 = vsel %vm485, 0.0, %v1656
        %v1659 = vsel %vm486, 0.0, %v1657
        %v1660 = vld [vmem:[#allocation11] sm:$0xff]
        %v1661 = vld [vmem:[#allocation11 + $0x8] sm:$0xff]
        %v1662 = vld [vmem:[#allocation11 + $0x10] sm:$0xff]
        %v1663 = vld [vmem:[#allocation11 + $0x18] sm:$0xff]
        %v1664 = vld [vmem:[#allocation11 + $0x20] sm:$0xff]
        %v1665 = vld [vmem:[#allocation11 + $0x28] sm:$0xff]
        %v1666 = vld [vmem:[#allocation11 + $0x30] sm:$0xff]
        %v1667 = vld [vmem:[#allocation11 + $0x38] sm:$0xff]
        %v1668 = vld [vmem:[#allocation11 + $0x40] sm:$0xff]
        %v1669 = vld [vmem:[#allocation11 + $0x48] sm:$0xff]
        %v1670 = vld [vmem:[#allocation11 + $0x50] sm:$0xff]
        %v1671 = vld [vmem:[#allocation11 + $0x58] sm:$0xff]
        %v1672 = vld [vmem:[#allocation11 + $0x60] sm:$0xff]
        %v1673 = vld [vmem:[#allocation11 + $0x68] sm:$0xff]
        %v1674 = vld [vmem:[#allocation11 + $0x70] sm:$0xff]
        %v1675 = vld [vmem:[#allocation11 + $0x78] sm:$0xff]
        %s1676 = scalar_lea.vmem [#allocation11], 128
        %v1677 = vld [vmem:[%s1676] sm:$0xff]
        %v1678 = vld [vmem:[%s1676 + $0x8] sm:$0xff]
        %v1679 = vld [vmem:[%s1676 + $0x10] sm:$0xff]
        %v1680 = vld [vmem:[%s1676 + $0x18] sm:$0xff]
        %v1681 = vld [vmem:[%s1676 + $0x20] sm:$0xff]
        %v1682 = vld [vmem:[%s1676 + $0x28] sm:$0xff]
        %v1683 = vld [vmem:[%s1676 + $0x30] sm:$0xff]
        %v1684 = vld [vmem:[%s1676 + $0x38] sm:$0xff]
        %v1685 = vld [vmem:[%s1676 + $0x40] sm:$0xff]
        %v1686 = vld [vmem:[%s1676 + $0x48] sm:$0xff]
        %v1687 = vld [vmem:[%s1676 + $0x50] sm:$0xff]
        %v1688 = vld [vmem:[%s1676 + $0x58] sm:$0xff]
        %v1689 = vld [vmem:[%s1676 + $0x60] sm:$0xff]
        %v1690 = vld [vmem:[%s1676 + $0x68] sm:$0xff]
        %v1691 = vld [vmem:[%s1676 + $0x70] sm:$0xff]
        %v1692 = vld [vmem:[%s1676 + $0x78] sm:$0xff]
        %1693 = vmatprep.subr.mxu0 0.0
        %1694 = vmatpush1.msra.mxu0 %v1677
        %1695 = vmatprep.subr.mxu0 0.0
        %1696 = vmatpush1.msra.mxu0 %v1678
        %1697 = vmatprep.subr.mxu0 0.0
        %1698 = vmatpush1.msra.mxu0 %v1679
        %1699 = vmatprep.subr.mxu0 0.0
        %1700 = vmatpush1.msra.mxu0 %v1680
        %1701 = vmatprep.subr.mxu0 0.0
        %1702 = vmatpush1.msra.mxu0 %v1681
        %1703 = vmatprep.subr.mxu0 0.0
        %1704 = vmatpush1.msra.mxu0 %v1682
        %1705 = vmatprep.subr.mxu0 0.0
        %1706 = vmatpush1.msra.mxu0 %v1683
        %1707 = vmatprep.subr.mxu0 0.0
        %1708 = vmatpush1.msra.mxu0 %v1684
        %1709 = vmatprep.subr.mxu0 0.0
        %1710 = vmatpush1.msra.mxu0 %v1685
        %1711 = vmatprep.subr.mxu0 0.0
        %1712 = vmatpush1.msra.mxu0 %v1686
        %1713 = vmatprep.subr.mxu0 0.0
        %1714 = vmatpush1.msra.mxu0 %v1687
        %1715 = vmatprep.subr.mxu0 0.0
        %1716 = vmatpush1.msra.mxu0 %v1688
        %1717 = vmatprep.subr.mxu0 0.0
        %1718 = vmatpush1.msra.mxu0 %v1689
        %1719 = vmatprep.subr.mxu0 0.0
        %1720 = vmatpush1.msra.mxu0 %v1690
        %1721 = vmatprep.subr.mxu0 0.0
        %1722 = vmatpush1.msra.mxu0 %v1691
        %1723 = vmatprep.subr.mxu0 0.0
        %1724 = vmatpush1.msra.mxu0 %v1692
        %1725 = vmatprep.subr.mxu0 0.0
        %1726 = vmatpush1.msra.mxu0 0.0
        %1727 = vmatprep.subr.mxu0 0.0
        %1728 = vmatpush1.msra.mxu0 0.0
        %1729 = vmatprep.subr.mxu0 0.0
        %1730 = vmatpush1.msra.mxu0 0.0
        %1731 = vmatprep.subr.mxu0 0.0
        %1732 = vmatpush1.msra.mxu0 0.0
        %1733 = vmatprep.subr.mxu0 0.0
        %1734 = vmatpush1.msra.mxu0 0.0
        %1735 = vmatprep.subr.mxu0 0.0
        %1736 = vmatpush1.msra.mxu0 0.0
        %1737 = vmatprep.subr.mxu0 0.0
        %1738 = vmatpush1.msra.mxu0 0.0
        %1739 = vmatprep.subr.mxu0 0.0
        %1740 = vmatpush1.msra.mxu0 0.0
        %1741 = vmatprep.subr.mxu0 0.0
        %1742 = vmatpush1.msra.mxu0 0.0
        %1743 = vmatprep.subr.mxu0 0.0
        %1744 = vmatpush1.msra.mxu0 0.0
        %1745 = vmatprep.subr.mxu0 0.0
        %1746 = vmatpush1.msra.mxu0 0.0
        %1747 = vmatprep.subr.mxu0 0.0
        %1748 = vmatpush1.msra.mxu0 0.0
        %1749 = vmatprep.subr.mxu0 0.0
        %1750 = vmatpush1.msra.mxu0 0.0
        %1751 = vmatprep.subr.mxu0 0.0
        %1752 = vmatpush1.msra.mxu0 0.0
        %1753 = vmatprep.subr.mxu0 0.0
        %1754 = vmatpush1.msra.mxu0 0.0
        %1755 = vmatprep.subr.mxu0 0.0
        %1756 = vmatpush1.msra.mxu0 0.0
        %1757 = vmatprep.mubr.f32.mxu0 0.0
        %1758 = vmatmul.mubr.f32.gmra.mrb[0].mxu0 %v1646
        %v1759 = vpop.f32.mrb[0].mxu0
        %v1760 = vadd.f32 0.0, %v1759
        %v1761 = vpop.f32.mrb[0].mxu0
        %1762 = vmatprep.mubr.f32.mxu0 0.0
        %1763 = vmatmul.mubr.f32.gmra.mrb[0].mxu0 %v1647
        %v1764 = vpop.f32.mrb[0].mxu0
        %v1765 = vadd.f32 0.0, %v1764
        %v1766 = vpop.f32.mrb[0].mxu0
        %1767 = vdwg.mxu0
        %1768 = vmatprep.subr.mxu0 0.0
        %1769 = vmatpush1.msra.mxu0 %v1660
        %1770 = vmatprep.subr.mxu0 0.0
        %1771 = vmatpush1.msra.mxu0 %v1661
        %1772 = vmatprep.subr.mxu0 0.0
        %1773 = vmatpush1.msra.mxu0 %v1662
        %1774 = vmatprep.subr.mxu0 0.0
        %1775 = vmatpush1.msra.mxu0 %v1663
        %1776 = vmatprep.subr.mxu0 0.0
        %1777 = vmatpush1.msra.mxu0 %v1664
        %1778 = vmatprep.subr.mxu0 0.0
        %1779 = vmatpush1.msra.mxu0 %v1665
        %1780 = vmatprep.subr.mxu0 0.0
        %1781 = vmatpush1.msra.mxu0 %v1666
        %1782 = vmatprep.subr.mxu0 0.0
        %1783 = vmatpush1.msra.mxu0 %v1667
        %1784 = vmatprep.subr.mxu0 0.0
        %1785 = vmatpush1.msra.mxu0 %v1668
        %1786 = vmatprep.subr.mxu0 0.0
        %1787 = vmatpush1.msra.mxu0 %v1669
        %1788 = vmatprep.subr.mxu0 0.0
        %1789 = vmatpush1.msra.mxu0 %v1670
        %1790 = vmatprep.subr.mxu0 0.0
        %1791 = vmatpush1.msra.mxu0 %v1671
        %1792 = vmatprep.subr.mxu0 0.0
        %1793 = vmatpush1.msra.mxu0 %v1672
        %1794 = vmatprep.subr.mxu0 0.0
        %1795 = vmatpush1.msra.mxu0 %v1673
        %1796 = vmatprep.subr.mxu0 0.0
        %1797 = vmatpush1.msra.mxu0 %v1674
        %1798 = vmatprep.subr.mxu0 0.0
        %1799 = vmatpush1.msra.mxu0 %v1675
        %1800 = vmatprep.subr.mxu0 0.0
        %1801 = vmatpush1.msra.mxu0 0.0
        %1802 = vmatprep.subr.mxu0 0.0
        %1803 = vmatpush1.msra.mxu0 0.0
        %1804 = vmatprep.subr.mxu0 0.0
        %1805 = vmatpush1.msra.mxu0 0.0
        %1806 = vmatprep.subr.mxu0 0.0
        %1807 = vmatpush1.msra.mxu0 0.0
        %1808 = vmatprep.subr.mxu0 0.0
        %1809 = vmatpush1.msra.mxu0 0.0
        %1810 = vmatprep.subr.mxu0 0.0
        %1811 = vmatpush1.msra.mxu0 0.0
        %1812 = vmatprep.subr.mxu0 0.0
        %1813 = vmatpush1.msra.mxu0 0.0
        %1814 = vmatprep.subr.mxu0 0.0
        %1815 = vmatpush1.msra.mxu0 0.0
        %1816 = vmatprep.subr.mxu0 0.0
        %1817 = vmatpush1.msra.mxu0 0.0
        %1818 = vmatprep.subr.mxu0 0.0
        %1819 = vmatpush1.msra.mxu0 0.0
        %1820 = vmatprep.subr.mxu0 0.0
        %1821 = vmatpush1.msra.mxu0 0.0
        %1822 = vmatprep.subr.mxu0 0.0
        %1823 = vmatpush1.msra.mxu0 0.0
        %1824 = vmatprep.subr.mxu0 0.0
        %1825 = vmatpush1.msra.mxu0 0.0
        %1826 = vmatprep.subr.mxu0 0.0
        %1827 = vmatpush1.msra.mxu0 0.0
        %1828 = vmatprep.subr.mxu0 0.0
        %1829 = vmatpush1.msra.mxu0 0.0
        %1830 = vmatprep.subr.mxu0 0.0
        %1831 = vmatpush1.msra.mxu0 0.0
        %1832 = vmatprep.mubr.f32.mxu0 0.0
        %1833 = vmatmul.mubr.f32.gmra.mrb[0].mxu0 %v1652
        %v1834 = vpop.f32.mrb[0].mxu0
        %v1835 = vadd.f32 %v1760, %v1834
        %v1836 = vpop.f32.mrb[0].mxu0
        %1837 = vmatprep.mubr.f32.mxu0 0.0
        %1838 = vmatmul.mubr.f32.gmra.mrb[0].mxu0 %v1653
        %v1839 = vpop.f32.mrb[0].mxu0
        %v1840 = vadd.f32 %v1765, %v1839
        %v1841 = vpop.f32.mrb[0].mxu0
        %1842 = vdwg.mxu0
        %s1843 = scalar_lea.vmem [#allocation11], 256
        %v1844 = vld [vmem:[%s1843] sm:$0xff]
        %v1845 = vld [vmem:[%s1843 + $0x8] sm:$0xff]
        %v1846 = vld [vmem:[%s1843 + $0x10] sm:$0xff]
        %v1847 = vld [vmem:[%s1843 + $0x18] sm:$0xff]
        %v1848 = vld [vmem:[%s1843 + $0x20] sm:$0xff]
        %v1849 = vld [vmem:[%s1843 + $0x28] sm:$0xff]
        %v1850 = vld [vmem:[%s1843 + $0x30] sm:$0xff]
        %v1851 = vld [vmem:[%s1843 + $0x38] sm:$0xff]
        %v1852 = vld [vmem:[%s1843 + $0x40] sm:$0xff]
        %v1853 = vld [vmem:[%s1843 + $0x48] sm:$0xff]
        %v1854 = vld [vmem:[%s1843 + $0x50] sm:$0xff]
        %v1855 = vld [vmem:[%s1843 + $0x58] sm:$0xff]
        %v1856 = vld [vmem:[%s1843 + $0x60] sm:$0xff]
        %v1857 = vld [vmem:[%s1843 + $0x68] sm:$0xff]
        %v1858 = vld [vmem:[%s1843 + $0x70] sm:$0xff]
        %v1859 = vld [vmem:[%s1843 + $0x78] sm:$0xff]
        %1860 = vmatprep.subr.mxu0 0.0
        %1861 = vmatpush1.msra.mxu0 %v1844
        %1862 = vmatprep.subr.mxu0 0.0
        %1863 = vmatpush1.msra.mxu0 %v1845
        %1864 = vmatprep.subr.mxu0 0.0
        %1865 = vmatpush1.msra.mxu0 %v1846
        %1866 = vmatprep.subr.mxu0 0.0
        %1867 = vmatpush1.msra.mxu0 %v1847
        %1868 = vmatprep.subr.mxu0 0.0
        %1869 = vmatpush1.msra.mxu0 %v1848
        %1870 = vmatprep.subr.mxu0 0.0
        %1871 = vmatpush1.msra.mxu0 %v1849
        %1872 = vmatprep.subr.mxu0 0.0
        %1873 = vmatpush1.msra.mxu0 %v1850
        %1874 = vmatprep.subr.mxu0 0.0
        %1875 = vmatpush1.msra.mxu0 %v1851
        %1876 = vmatprep.subr.mxu0 0.0
        %1877 = vmatpush1.msra.mxu0 %v1852
        %1878 = vmatprep.subr.mxu0 0.0
        %1879 = vmatpush1.msra.mxu0 %v1853
        %1880 = vmatprep.subr.mxu0 0.0
        %1881 = vmatpush1.msra.mxu0 %v1854
        %1882 = vmatprep.subr.mxu0 0.0
        %1883 = vmatpush1.msra.mxu0 %v1855
        %1884 = vmatprep.subr.mxu0 0.0
        %1885 = vmatpush1.msra.mxu0 %v1856
        %1886 = vmatprep.subr.mxu0 0.0
        %1887 = vmatpush1.msra.mxu0 %v1857
        %1888 = vmatprep.subr.mxu0 0.0
        %1889 = vmatpush1.msra.mxu0 %v1858
        %1890 = vmatprep.subr.mxu0 0.0
        %1891 = vmatpush1.msra.mxu0 %v1859
        %1892 = vmatprep.subr.mxu0 0.0
        %1893 = vmatpush1.msra.mxu0 0.0
        %1894 = vmatprep.subr.mxu0 0.0
        %1895 = vmatpush1.msra.mxu0 0.0
        %1896 = vmatprep.subr.mxu0 0.0
        %1897 = vmatpush1.msra.mxu0 0.0
        %1898 = vmatprep.subr.mxu0 0.0
        %1899 = vmatpush1.msra.mxu0 0.0
        %1900 = vmatprep.subr.mxu0 0.0
        %1901 = vmatpush1.msra.mxu0 0.0
        %1902 = vmatprep.subr.mxu0 0.0
        %1903 = vmatpush1.msra.mxu0 0.0
        %1904 = vmatprep.subr.mxu0 0.0
        %1905 = vmatpush1.msra.mxu0 0.0
        %1906 = vmatprep.subr.mxu0 0.0
        %1907 = vmatpush1.msra.mxu0 0.0
        %1908 = vmatprep.subr.mxu0 0.0
        %1909 = vmatpush1.msra.mxu0 0.0
        %1910 = vmatprep.subr.mxu0 0.0
        %1911 = vmatpush1.msra.mxu0 0.0
        %1912 = vmatprep.subr.mxu0 0.0
        %1913 = vmatpush1.msra.mxu0 0.0
        %1914 = vmatprep.subr.mxu0 0.0
        %1915 = vmatpush1.msra.mxu0 0.0
        %1916 = vmatprep.subr.mxu0 0.0
        %1917 = vmatpush1.msra.mxu0 0.0
        %1918 = vmatprep.subr.mxu0 0.0
        %1919 = vmatpush1.msra.mxu0 0.0
        %1920 = vmatprep.subr.mxu0 0.0
        %1921 = vmatpush1.msra.mxu0 0.0
        %1922 = vmatprep.subr.mxu0 0.0
        %1923 = vmatpush1.msra.mxu0 0.0
        %1924 = vmatprep.mubr.f32.mxu0 0.0
        %1925 = vmatmul.mubr.f32.gmra.mrb[0].mxu0 %v1658
        %v1926 = vpop.f32.mrb[0].mxu0
        %v1927 = vadd.f32 0.0, %v1926
        %v1928 = vpop.f32.mrb[0].mxu0
        %1929 = vmatprep.mubr.f32.mxu0 0.0
        %1930 = vmatmul.mubr.f32.gmra.mrb[0].mxu0 %v1659
        %v1931 = vpop.f32.mrb[0].mxu0
        %v1932 = vadd.f32 0.0, %v1931
        %v1933 = vpop.f32.mrb[0].mxu0
        %1934 = vdwg.mxu0
        %v1935 = vadd.f32 %v1835, %v1927
        %v1936 = vadd.f32 %v1840, %v1932
        %v1937 = vld [vmem:[%s10] sm:$0x1]
        %v1939 = vlaneseq
        %v1940 = vshrl.u32 %v1939, 7
        %v1941 = vsub.s32 0, %v1940
        %v1942 = vrot.slane %v1937, %v1941
        %v1944 = vadd.f32 %v1935, %v1942
        %v1945 = vadd.f32 %v1936, %v1942
        %v1946 = vadd.f32 %v1944, %v1346
        %v1947 = vadd.f32 %v1945, %v1347
        %v1948 = vmax.f32 %v1946, 0.0
        %v1949 = vmax.f32 %v1947, 0.0
        %1950 = vst [vmem:[%s477] sm:$0xff] %v1948
        %1951 = vst [vmem:[%s477 + $0x8] sm:$0xff] %v1949
        %s1952 = sand.u32 %s275, 1
        %s1953 = scalar_lea.sflag [#allocation4], %s1952
        %s1954 = sand.u32 %s275, 1
        %s1955 = smul.addr %s1954, 16
        %s1956 = scalar_lea.vmem [#allocation13], %s1955
        // Predicated region
        $region89: #{tpu_custom_call.1} parent=63 // pred_check
          %p1957 = pneg %p285
        $region90: #{tpu_custom_call.1} parent=63 // pred_check_branch
          %1959 = sbr.rel (%p1957) target = $region92
        $region91: #{tpu_custom_call.1} parent=63 // pred_region
          %s1961 = ssub.s32 256, 256
          %1962 = vsyncadd %s1953, %s1961
          %s1963 = smul.addr %s31, 2
          %s1964 = smul.addr %s1963, 128
          %s1965 = scalar_lea.hbm %s11, %s1964
          %s1966 = sshll.u32 %s1956, 4
          %s1967 = int_to_ptr.vmem [resolvable:$true] %s1966
          %1972 = dma.vmem_to_hbm [thread:$0]  %s1967, 256, %s1965, %s1953, 128, 128, 8
        $region92: #{tpu_custom_call.1} parent=63 // pred_fallthru
          _
      $region64: #{tpu_custom_call.1} parent=5 // pred_fallthru
        _
      %p1973 = scmp.le.s32.totalorder 2, %s26
      // Predicated region
      $region93: #{tpu_custom_call.1} parent=5 // pred_check
        %p1974 = pneg %p1973
      $region94: #{tpu_custom_call.1} parent=5 // pred_check_branch
        %1976 = sbr.rel (%p1974) target = $region96
      $region95: #{tpu_custom_call.1} parent=5 // pred_region
        %s1977 = ssub.s32 %s26, 2
        // Predicated region
        $region97: #{tpu_custom_call.1} parent=95 // pred_check
          %p1978 = pneg %p291
        $region98: #{tpu_custom_call.1} parent=95 // pred_check_branch
          %1980 = sbr.rel (%p1978) target = $region100
        $region99: #{tpu_custom_call.1} parent=95 // pred_region
          %s1981 = sand.u32 %s276, 1
          %s1982 = scalar_lea.sflag [#allocation4], %s1981
          %s1983 = sand.u32 %s276, 1
          %s1984 = smul.addr %s1983, 16
          %s1985 = scalar_lea.vmem [#allocation13], %s1984
          %1986 = dma.done %s1982, 256
        $region100: #{tpu_custom_call.1} parent=95 // pred_fallthru
          _
      $region96: #{tpu_custom_call.1} parent=5 // pred_fallthru
        _
    $region6: #{tpu_custom_call.1} parent=1 // loop_footer
      %s30 = sadd.s32 1, %s26
    $region7: #{tpu_custom_call.1} parent=1 // loop_footer_branch
      %25 = sbr.rel target = $region3
    $region8: #{tpu_custom_call.1} parent=1 // loop_exit
      _
    %1987 = vsyncpa [#allocation3], 1
    %s1988 = scalar_lea.sflag [#allocation3], 1
    %1989 = vsyncpa %s1988, 1
    %1990 = vsyncpa [#allocation6], 1
    %1991 = vsyncpa [#allocation9], 1
    %1992 = vsyncpa [#allocation12], 1
    %1993 = vsyncpa [#allocation4], 1
    %s1994 = scalar_lea.sflag [#allocation4], 1
    %1995 = vsyncpa %s1994, 1

</llo_original>
